<compile_context>
chip_gen: v7x
topology: tpu7x:2x2x1
jax: 0.10.0
libtpu: 0.0.40
codegen_flags: <defaults>
</compile_context>

<pallas_src>
import numpy as np
import jax
import jax.numpy as jnp
from jax import lax
from jax.experimental import pallas as pl
from jax.experimental.pallas import tpu as pltpu


# --------------------------------------------------------------------------- kernel
def _discriminator_kernel(x_ref, w1_ref, w2_ref, b2_ref, w3_ref, b3_ref, w4_ref,
                          feat_ref, cls_ref, h1_ref, h2_ref):
    """One grid step == one batch block of B samples.

    Activation layout: (B, rows, W*C) with a 128-wide lane dim at every layer.
    h1_ref / h2_ref are zero-padded VMEM scratch: data rows live at [8, 8+OH),
    the halo rows around them are zeroed so the stride-2 tap gather can read
    "out of image" rows as zeros.
    """
    bb, hp, _ = x_ref.shape
    oh1 = (hp - 2) // 2          # 16
    oh2 = oh1 // 2               # 8
    oh3p = oh2                   # layer-3 rows padded 4 -> 8 (tile-aligned folds)
    f32 = jnp.float32

    def lrelu(t):
        return jnp.maximum(t, 0.2 * t)

    def gather4(ref, start, size):
        # rows (start + di) + 2*oh for di in 0..3, taps concatenated along lanes
        return jnp.concatenate(
            [ref[:, pl.ds(start + di, size, 2), :] for di in range(4)], axis=2)

    # ---------------- layer 1: Conv(nc->ndf, 4, s2, p1) + LeakyReLU ----------
    g1 = gather4(x_ref, 0, oh1).astype(jnp.bfloat16)              # (B, 16, 512)
    a1 = lrelu(jnp.dot(g1.reshape(bb * oh1, g1.shape[2]), w1_ref[...],
                       preferred_element_type=f32))               # (B*16, 128)
    n1 = a1.shape[1]
    sc1_h = h1_ref.shape[1]
    h1_ref[:, 0:8, :] = jnp.zeros((bb, 8, n1), f32)
    h1_ref[:, 8 + oh1:sc1_h, :] = jnp.zeros((bb, sc1_h - 8 - oh1, n1), f32)
    h1_ref[:, 8:8 + oh1, :] = a1.reshape(bb, oh1, n1)              # aligned store

    # ---------------- layer 2: Conv + folded BN + LeakyReLU ------------------
    g2 = gather4(h1_ref, 7, oh2).astype(jnp.bfloat16)              # (B, 8, 512)
    a2 = lrelu(jnp.dot(g2.reshape(bb * oh2, g2.shape[2]), w2_ref[...],
                       preferred_element_type=f32) + b2_ref[...])  # (B*8, 128)
    n2 = a2.shape[1]
    sc2_h = h2_ref.shape[1]
    h2_ref[:, 0:8, :] = jnp.zeros((bb, 8, n2), f32)
    h2_ref[:, 8 + oh2:sc2_h, :] = jnp.zeros((bb, sc2_h - 8 - oh2, n2), f32)
    h2_ref[:, 8:8 + oh2, :] = a2.reshape(bb, oh2, n2)

    # ---------------- layer 3: Conv + folded BN + LeakyReLU ------------------
    # Output rows padded 4 -> 8; the extra rows only read zeroed halo rows, are
    # never used by the classifier (w4 padding rows are zero) and are sliced
    # off in the wrapper.
    g3 = gather4(h2_ref, 7, oh3p).astype(jnp.bfloat16)             # (B, 8, 512)
    a3 = lrelu(jnp.dot(g3.reshape(bb * oh3p, g3.shape[2]), w3_ref[...],
                       preferred_element_type=f32) + b3_ref[...])  # (B*8, 128)
    n3 = a3.shape[1]
    a3 = a3.reshape(bb, oh3p, n3)
    feat_ref[...] = a3                                             # f32 features

    # ---------------- classifier: 4x4 valid conv == masked dot, sigmoid ------
    prod = a3 * w4_ref[...]                                        # (B, 8, 128)
    t = jnp.sum(jnp.sum(prod, axis=2, keepdims=True), axis=1, keepdims=True)
    z = jnp.exp(-jnp.abs(t))                                       # stable sigmoid
    cls_ref[...] = jnp.where(t >= 0.0, 1.0 / (1.0 + z), z / (1.0 + z))


# ----------------------------------------------------------------- trace-time helpers
def _round_up(x, m):
    return ((x + m - 1) // m) * m


def bn_scale_shift(gamma, beta, running_mean, running_var, eps=1e-5):
    # TODO(synk): inference-mode (running-stats) BatchNorm folding only.
    scale = gamma / jnp.sqrt(running_var + eps)
    shift = beta - running_mean * scale
    return scale, shift


def _merged_conv_weight(w_oihw, scale, w_in, cin_pad):
    """(4*W_in*Cin_pad, OW*Cout) bf16 matrix.

    All four kernel-row taps are merged along K (matching the in-kernel lane
    concat order di, w, c); the column-tap selection for stride 2 / pad 1 and
    the BatchNorm scale are baked in.
    """
    cout, cin, kh, kw = w_oihw.shape
    ow_n = w_in // 2
    s = np.zeros((w_in, ow_n, kw), np.float32)
    for ow in range(ow_n):
        for dj in range(kw):
            wi = 2 * ow + dj - 1
            if 0 <= wi < w_in:
                s[wi, ow, dj] = 1.0
    ws = w_oihw.astype(jnp.float32) * scale.astype(jnp.float32)[:, None, None, None]
    if cin_pad != cin:
        ws = jnp.pad(ws, ((0, 0), (0, cin_pad - cin), (0, 0), (0, 0)))
    b = jnp.einsum('woj,pcij->iwcop', jnp.asarray(s), ws)   # (kh, W, Cin_p, OW, Cout)
    return b.reshape(kh * w_in * cin_pad, ow_n * cout).astype(jnp.bfloat16)


def _bias_row(shift, ow_n):
    return jnp.tile(shift.astype(jnp.float32), ow_n).reshape(1, -1)


def init_params(key, nc=3, ndf=8):
    ks = jax.random.split(key, 8)

    def w(k, shape):  # DCGAN-style init, deterministic
        return 0.02 * jax.random.normal(k, shape, jnp.float32)

    return {
        "w1": w(ks[0], (ndf,      nc,      4, 4)),
        "w2": w(ks[1], (ndf * 2,  ndf,     4, 4)),
        "w3": w(ks[2], (ndf * 4,  ndf * 2, 4, 4)),
        "w4": w(ks[3], (1,        ndf * 4, 4, 4)),
        "bn2": (1.0 + 0.1 * jax.random.normal(ks[4], (ndf * 2,), jnp.float32),  # gamma
                0.1 * jax.random.normal(ks[5], (ndf * 2,), jnp.float32),        # beta
                jnp.zeros((ndf * 2,), jnp.float32),                             # mean
                jnp.ones((ndf * 2,), jnp.float32)),                             # var
        "bn3": (1.0 + 0.1 * jax.random.normal(ks[6], (ndf * 4,), jnp.float32),
                0.1 * jax.random.normal(ks[7], (ndf * 4,), jnp.float32),
                jnp.zeros((ndf * 4,), jnp.float32),
                jnp.ones((ndf * 4,), jnp.float32)),
    }


# --------------------------------------------------------------------------- forward
def discriminator_forward(x_nchw, params, *, block_batch=8):
    """Returns (classifier, features) matching the PyTorch module semantics."""
    n, nc, isize, _ = x_nchw.shape
    ndf = params["w1"].shape[0]
    # the final 4x4 valid classifier conv fixes the layer stack to isize == 32
    assert isize == 32 and nc <= 4 and ndf == 8
    assert block_batch % 8 == 0

    oh1, oh2, oh3 = isize // 2, isize // 4, isize // 8
    oh3p = oh2                                  # layer-3 rows padded 4 -> 8

    # NCHW -> (N, H+2, W*4): NHWC, channels padded to 4, +1/+1 zero rows.
    x = jnp.transpose(x_nchw, (0, 2, 3, 1)).astype(jnp.float32)
    x = jnp.pad(x, ((0, 0), (1, 1), (0, 0), (0, 4 - nc)))
    x = x.reshape(n, isize + 2, isize * 4)

    bb = block_batch
    n_pad = _round_up(max(n, 1), bb)
    if n_pad != n:
        x = jnp.pad(x, ((0, n_pad - n), (0, 0), (0, 0)))

    one = jnp.ones((ndf,), jnp.float32)
    s2, sh2 = bn_scale_shift(*params["bn2"])
    s3, sh3 = bn_scale_shift(*params["bn3"])

    W1 = _merged_conv_weight(params["w1"], one, isize, 4)        # (512, 128)
    W2 = _merged_conv_weight(params["w2"], s2, oh1, ndf)         # (512, 128)
    W3 = _merged_conv_weight(params["w3"], s3, oh2, 2 * ndf)     # (512, 128)
    b2 = _bias_row(sh2, oh2)                                     # (1, 128)
    b3 = _bias_row(sh3, oh3)                                     # (1, 128)

    # classifier weight in the (row, ow*Cout) activation layout, padded to 8 rows
    w4 = params["w4"]                                            # (1, 4*ndf, 4, 4)
    w4p = jnp.transpose(w4[0], (1, 2, 0)).reshape(oh3, -1)       # (4, 128)
    w4p = jnp.pad(w4p, ((0, oh3p - oh3), (0, 0)))[None].astype(jnp.float32)

    sc1_h = _round_up(9 + oh1, 8)                                # 32
    sc2_h = _round_up(9 + 2 * oh2, 8)                            # 32

    grid = (n_pad // bb,)
    feat, cls = pl.pallas_call(
        _discriminator_kernel,
        grid=grid,
        in_specs=[
            pl.BlockSpec((bb, isize + 2, isize * 4), lambda i: (i, 0, 0)),
            pl.BlockSpec(W1.shape, lambda i: (0, 0)),
            pl.BlockSpec(W2.shape, lambda i: (0, 0)),
            pl.BlockSpec(b2.shape, lambda i: (0, 0)),
            pl.BlockSpec(W3.shape, lambda i: (0, 0)),
            pl.BlockSpec(b3.shape, lambda i: (0, 0)),
            pl.BlockSpec(w4p.shape, lambda i: (0, 0, 0)),
        ],
        out_specs=[
            pl.BlockSpec((bb, oh3p, W3.shape[1]), lambda i: (i, 0, 0)),
            pl.BlockSpec((bb, 1, 1), lambda i: (i, 0, 0)),
        ],
        out_shape=[
            jax.ShapeDtypeStruct((n_pad, oh3p, W3.shape[1]), jnp.float32),
            jax.ShapeDtypeStruct((n_pad, 1, 1), jnp.float32),
        ],
        scratch_shapes=[
            pltpu.VMEM((bb, sc1_h, W1.shape[1]), jnp.float32),
            pltpu.VMEM((bb, sc2_h, W2.shape[1]), jnp.float32),
        ],
        compiler_params=pltpu.CompilerParams(
            dimension_semantics=("parallel",)),   # batch blocks split across TCs on v7x
    )(x, W1, W2, b2, W3, b3, w4p)

    cfeat = 4 * ndf
    features = feat[:n, :oh3, :].reshape(n, oh3, oh3, cfeat).transpose(0, 3, 1, 2)
    classifier = cls[:n, 0, 0]
    return classifier, features


# --------------------------------------------------------------------------- reference
def _reference_forward(x_nchw, params):
    """Pure-JAX (XLA conv) reference of the same forward pass, f32 end to end."""
    def conv(x, w, stride, pad):
        return lax.conv_general_dilated(
            x, w, window_strides=(stride, stride),
            padding=((pad, pad), (pad, pad)),
            dimension_numbers=("NCHW", "OIHW", "NCHW"))

    def bn(x, p, eps=1e-5):
        g, b, m, v = p
        inv = g / jnp.sqrt(v + eps)
        return x * inv[None, :, None, None] + (b - m * inv)[None, :, None, None]

    def lrelu(t):
        return jnp.where(t > 0, t, 0.2 * t)

    h = lrelu(conv(x_nchw, params["w1"], 2, 1))
    h = lrelu(bn(conv(h, params["w2"], 2, 1), params["bn2"]))
    h = lrelu(bn(conv(h, params["w3"], 2, 1), params["bn3"]))
    cls = jax.nn.sigmoid(conv(h, params["w4"], 1, 0)).reshape(-1)
    return cls, h


if __name__ == "__main__":
    key = jax.random.PRNGKey(0)
    k_x, k_p = jax.random.split(key)

    batch, nc, isize, ndf = 4, 3, 32, 8
    x = jax.random.normal(k_x, (batch, nc, isize, isize), jnp.float32)
    params = init_params(k_p, nc=nc, ndf=ndf)

    fwd = jax.jit(discriminator_forward)
    classifier, features = fwd(x, params)
    jax.block_until_ready((classifier, features))

    assert classifier.shape == (batch,)
    assert features.shape == (batch, 4 * ndf, 4, 4)
    assert bool(jnp.all((classifier >= 0.0) & (classifier <= 1.0)))
    assert bool(jnp.all(jnp.isfinite(features)))

    # cross-check against a pure-JAX/XLA reference (bf16 MXU operands => loose tol)
    ref_cls, ref_feat = jax.jit(_reference_forward)(x, params)
    jax.block_until_ready((ref_cls, ref_feat))
    np.testing.assert_allclose(np.asarray(features), np.asarray(ref_feat),
                               rtol=5e-2, atol=3e-2)
    np.testing.assert_allclose(np.asarray(classifier), np.asarray(ref_cls),
                               rtol=5e-2, atol=1e-2)

    print("KERNEL_OK")
</pallas_src>

<mosaic_0001>
module attributes {stable_mosaic.version = 11 : i64} {
  func.func @_discriminator_kernel(%arg0: i32, %arg1: memref<8x34x128xf32, #tpu.memory_space<vmem>>, %arg2: memref<512x128xbf16, #tpu.memory_space<vmem>>, %arg3: memref<512x128xbf16, #tpu.memory_space<vmem>>, %arg4: memref<1x128xf32, #tpu.memory_space<vmem>>, %arg5: memref<512x128xbf16, #tpu.memory_space<vmem>>, %arg6: memref<1x128xf32, #tpu.memory_space<vmem>>, %arg7: memref<1x8x128xf32, #tpu.memory_space<vmem>>, %arg8: memref<8x8x128xf32, #tpu.memory_space<vmem>>, %arg9: memref<8x1x1xf32, #tpu.memory_space<vmem>>, %arg10: memref<8x32x128xf32, #tpu.memory_space<vmem>>, %arg11: memref<8x32x128xf32, #tpu.memory_space<vmem>>) attributes {dimension_semantics = [#tpu.dimension_semantics<parallel>], iteration_bounds = array<i64: 1>, scalar_prefetch = 0 : i64, scratch_operands = 2 : i64, tpu.core_type = #tpu.core_type<tc>, window_params = [{transform_indices = @transform_0, window_bounds = array<i64: 8, 34, 128>}, {pipeline_mode = #tpu.pipeline_mode<synchronous>, transform_indices = @transform_1, window_bounds = array<i64: 512, 128>}, {pipeline_mode = #tpu.pipeline_mode<synchronous>, transform_indices = @transform_2, window_bounds = array<i64: 512, 128>}, {pipeline_mode = #tpu.pipeline_mode<synchronous>, transform_indices = @transform_3, window_bounds = array<i64: 1, 128>}, {pipeline_mode = #tpu.pipeline_mode<synchronous>, transform_indices = @transform_4, window_bounds = array<i64: 512, 128>}, {pipeline_mode = #tpu.pipeline_mode<synchronous>, transform_indices = @transform_5, window_bounds = array<i64: 1, 128>}, {pipeline_mode = #tpu.pipeline_mode<synchronous>, transform_indices = @transform_6, window_bounds = array<i64: 1, 8, 128>}, {transform_indices = @transform_7, window_bounds = array<i64: 8, 8, 128>}, {transform_indices = @transform_8, window_bounds = array<i64: 8, 1, 1>}]} {
    %c0 = arith.constant 0 : index
    %c0_0 = arith.constant 0 : index
    %c0_1 = arith.constant 0 : index
    %0 = tpu.strided_load %arg1[%c0, %c0_0, %c0_1] {strides = array<i32: 1, 2, 1>} : memref<8x34x128xf32, #tpu.memory_space<vmem>>, vector<8x16x128xf32>
    %c0_2 = arith.constant 0 : index
    %c1 = arith.constant 1 : index
    %c0_3 = arith.constant 0 : index
    %1 = tpu.strided_load %arg1[%c0_2, %c1, %c0_3] {strides = array<i32: 1, 2, 1>} : memref<8x34x128xf32, #tpu.memory_space<vmem>>, vector<8x16x128xf32>
    %c0_4 = arith.constant 0 : index
    %c2 = arith.constant 2 : index
    %c0_5 = arith.constant 0 : index
    %2 = tpu.strided_load %arg1[%c0_4, %c2, %c0_5] {strides = array<i32: 1, 2, 1>} : memref<8x34x128xf32, #tpu.memory_space<vmem>>, vector<8x16x128xf32>
    %c0_6 = arith.constant 0 : index
    %c3 = arith.constant 3 : index
    %c0_7 = arith.constant 0 : index
    %3 = tpu.strided_load %arg1[%c0_6, %c3, %c0_7] {strides = array<i32: 1, 2, 1>} : memref<8x34x128xf32, #tpu.memory_space<vmem>>, vector<8x16x128xf32>
    %4 = tpu.concatenate %0, %1, %2, %3 in 2 : vector<8x16x128xf32>, vector<8x16x128xf32>, vector<8x16x128xf32>, vector<8x16x128xf32> -> vector<8x16x512xf32>
    %5 = arith.truncf %4 : vector<8x16x512xf32> to vector<8x16x512xbf16>
    %6 = vector.shape_cast %5 : vector<8x16x512xbf16> to vector<128x512xbf16>
    %c0_8 = arith.constant 0 : index
    %c0_9 = arith.constant 0 : index
    %7 = vector.load %arg2[%c0_8, %c0_9] : memref<512x128xbf16, #tpu.memory_space<vmem>>, vector<512x128xbf16>
    %cst = arith.constant dense<0.000000e+00> : vector<128x128xf32>
    %8 = tpu.matmul %6, %7, %cst {dimension_numbers = #tpu.dot_dimension_numbers<[1], [0], [0], [1], [0, 0, 1, 1], [], []>} : vector<128x512xbf16>, vector<512x128xbf16>, vector<128x128xf32> -> vector<128x128xf32>
    %cst_10 = arith.constant 2.000000e-01 : f32
    %9 = vector.broadcast %cst_10 : f32 to vector<128x128xf32>
    %10 = arith.mulf %9, %8 : vector<128x128xf32>
    %11 = arith.maximumf %8, %10 : vector<128x128xf32>
    %cst_11 = arith.constant 0.000000e+00 : f32
    %12 = vector.broadcast %cst_11 : f32 to vector<8x8x128xf32>
    %c0_12 = arith.constant 0 : index
    %c0_13 = arith.constant 0 : index
    %c0_14 = arith.constant 0 : index
    %13 = vector.load %arg10[%c0_12, %c0_13, %c0_14] : memref<8x32x128xf32, #tpu.memory_space<vmem>>, vector<8x8x128xf32>
    tpu.vector_store %arg10[%c0_12, %c0_13, %c0_14], %12 {strides = array<i32>} : memref<8x32x128xf32, #tpu.memory_space<vmem>>, vector<8x8x128xf32>,
    %cst_15 = arith.constant 0.000000e+00 : f32
    %14 = vector.broadcast %cst_15 : f32 to vector<8x8x128xf32>
    %c0_16 = arith.constant 0 : index
    %c24 = arith.constant 24 : index
    %c0_17 = arith.constant 0 : index
    %15 = vector.load %arg10[%c0_16, %c24, %c0_17] : memref<8x32x128xf32, #tpu.memory_space<vmem>>, vector<8x8x128xf32>
    tpu.vector_store %arg10[%c0_16, %c24, %c0_17], %14 {strides = array<i32>} : memref<8x32x128xf32, #tpu.memory_space<vmem>>, vector<8x8x128xf32>,
    %16 = vector.shape_cast %11 : vector<128x128xf32> to vector<8x16x128xf32>
    %c0_18 = arith.constant 0 : index
    %c8 = arith.constant 8 : index
    %c0_19 = arith.constant 0 : index
    %17 = vector.load %arg10[%c0_18, %c8, %c0_19] : memref<8x32x128xf32, #tpu.memory_space<vmem>>, vector<8x16x128xf32>
    tpu.vector_store %arg10[%c0_18, %c8, %c0_19], %16 {strides = array<i32>} : memref<8x32x128xf32, #tpu.memory_space<vmem>>, vector<8x16x128xf32>,
    %c0_20 = arith.constant 0 : index
    %c7 = arith.constant 7 : index
    %c0_21 = arith.constant 0 : index
    %18 = tpu.strided_load %arg10[%c0_20, %c7, %c0_21] {strides = array<i32: 1, 2, 1>} : memref<8x32x128xf32, #tpu.memory_space<vmem>>, vector<8x8x128xf32>
    %c0_22 = arith.constant 0 : index
    %c8_23 = arith.constant 8 : index
    %c0_24 = arith.constant 0 : index
    %19 = tpu.strided_load %arg10[%c0_22, %c8_23, %c0_24] {strides = array<i32: 1, 2, 1>} : memref<8x32x128xf32, #tpu.memory_space<vmem>>, vector<8x8x128xf32>
    %c0_25 = arith.constant 0 : index
    %c9 = arith.constant 9 : index
    %c0_26 = arith.constant 0 : index
    %20 = tpu.strided_load %arg10[%c0_25, %c9, %c0_26] {strides = array<i32: 1, 2, 1>} : memref<8x32x128xf32, #tpu.memory_space<vmem>>, vector<8x8x128xf32>
    %c0_27 = arith.constant 0 : index
    %c10 = arith.constant 10 : index
    %c0_28 = arith.constant 0 : index
    %21 = tpu.strided_load %arg10[%c0_27, %c10, %c0_28] {strides = array<i32: 1, 2, 1>} : memref<8x32x128xf32, #tpu.memory_space<vmem>>, vector<8x8x128xf32>
    %22 = tpu.concatenate %18, %19, %20, %21 in 2 : vector<8x8x128xf32>, vector<8x8x128xf32>, vector<8x8x128xf32>, vector<8x8x128xf32> -> vector<8x8x512xf32>
    %23 = arith.truncf %22 : vector<8x8x512xf32> to vector<8x8x512xbf16>
    %24 = vector.shape_cast %23 : vector<8x8x512xbf16> to vector<64x512xbf16>
    %c0_29 = arith.constant 0 : index
    %c0_30 = arith.constant 0 : index
    %25 = vector.load %arg3[%c0_29, %c0_30] : memref<512x128xbf16, #tpu.memory_space<vmem>>, vector<512x128xbf16>
    %cst_31 = arith.constant dense<0.000000e+00> : vector<64x128xf32>
    %26 = tpu.matmul %24, %25, %cst_31 {dimension_numbers = #tpu.dot_dimension_numbers<[1], [0], [0], [1], [0, 0, 1, 1], [], []>} : vector<64x512xbf16>, vector<512x128xbf16>, vector<64x128xf32> -> vector<64x128xf32>
    %c0_32 = arith.constant 0 : index
    %c0_33 = arith.constant 0 : index
    %27 = vector.load %arg4[%c0_32, %c0_33] : memref<1x128xf32, #tpu.memory_space<vmem>>, vector<1x128xf32>
    %28 = vector.broadcast %27 : vector<1x128xf32> to vector<64x128xf32>
    %29 = arith.addf %26, %28 : vector<64x128xf32>
    %cst_34 = arith.constant 2.000000e-01 : f32
    %30 = vector.broadcast %cst_34 : f32 to vector<64x128xf32>
    %31 = arith.mulf %30, %29 : vector<64x128xf32>
    %32 = arith.maximumf %29, %31 : vector<64x128xf32>
    %cst_35 = arith.constant 0.000000e+00 : f32
    %33 = vector.broadcast %cst_35 : f32 to vector<8x8x128xf32>
    %c0_36 = arith.constant 0 : index
    %c0_37 = arith.constant 0 : index
    %c0_38 = arith.constant 0 : index
    %34 = vector.load %arg11[%c0_36, %c0_37, %c0_38] : memref<8x32x128xf32, #tpu.memory_space<vmem>>, vector<8x8x128xf32>
    tpu.vector_store %arg11[%c0_36, %c0_37, %c0_38], %33 {strides = array<i32>} : memref<8x32x128xf32, #tpu.memory_space<vmem>>, vector<8x8x128xf32>,
    %cst_39 = arith.constant 0.000000e+00 : f32
    %35 = vector.broadcast %cst_39 : f32 to vector<8x16x128xf32>
    %c0_40 = arith.constant 0 : index
    %c16 = arith.constant 16 : index
    %c0_41 = arith.constant 0 : index
    %36 = vector.load %arg11[%c0_40, %c16, %c0_41] : memref<8x32x128xf32, #tpu.memory_space<vmem>>, vector<8x16x128xf32>
    tpu.vector_store %arg11[%c0_40, %c16, %c0_41], %35 {strides = array<i32>} : memref<8x32x128xf32, #tpu.memory_space<vmem>>, vector<8x16x128xf32>,
    %37 = vector.shape_cast %32 : vector<64x128xf32> to vector<8x8x128xf32>
    %c0_42 = arith.constant 0 : index
    %c8_43 = arith.constant 8 : index
    %c0_44 = arith.constant 0 : index
    %38 = vector.load %arg11[%c0_42, %c8_43, %c0_44] : memref<8x32x128xf32, #tpu.memory_space<vmem>>, vector<8x8x128xf32>
    tpu.vector_store %arg11[%c0_42, %c8_43, %c0_44], %37 {strides = array<i32>} : memref<8x32x128xf32, #tpu.memory_space<vmem>>, vector<8x8x128xf32>,
    %c0_45 = arith.constant 0 : index
    %c7_46 = arith.constant 7 : index
    %c0_47 = arith.constant 0 : index
    %39 = tpu.strided_load %arg11[%c0_45, %c7_46, %c0_47] {strides = array<i32: 1, 2, 1>} : memref<8x32x128xf32, #tpu.memory_space<vmem>>, vector<8x8x128xf32>
    %c0_48 = arith.constant 0 : index
    %c8_49 = arith.constant 8 : index
    %c0_50 = arith.constant 0 : index
    %40 = tpu.strided_load %arg11[%c0_48, %c8_49, %c0_50] {strides = array<i32: 1, 2, 1>} : memref<8x32x128xf32, #tpu.memory_space<vmem>>, vector<8x8x128xf32>
    %c0_51 = arith.constant 0 : index
    %c9_52 = arith.constant 9 : index
    %c0_53 = arith.constant 0 : index
    %41 = tpu.strided_load %arg11[%c0_51, %c9_52, %c0_53] {strides = array<i32: 1, 2, 1>} : memref<8x32x128xf32, #tpu.memory_space<vmem>>, vector<8x8x128xf32>
    %c0_54 = arith.constant 0 : index
    %c10_55 = arith.constant 10 : index
    %c0_56 = arith.constant 0 : index
    %42 = tpu.strided_load %arg11[%c0_54, %c10_55, %c0_56] {strides = array<i32: 1, 2, 1>} : memref<8x32x128xf32, #tpu.memory_space<vmem>>, vector<8x8x128xf32>
    %43 = tpu.concatenate %39, %40, %41, %42 in 2 : vector<8x8x128xf32>, vector<8x8x128xf32>, vector<8x8x128xf32>, vector<8x8x128xf32> -> vector<8x8x512xf32>
    %44 = arith.truncf %43 : vector<8x8x512xf32> to vector<8x8x512xbf16>
    %45 = vector.shape_cast %44 : vector<8x8x512xbf16> to vector<64x512xbf16>
    %c0_57 = arith.constant 0 : index
    %c0_58 = arith.constant 0 : index
    %46 = vector.load %arg5[%c0_57, %c0_58] : memref<512x128xbf16, #tpu.memory_space<vmem>>, vector<512x128xbf16>
    %cst_59 = arith.constant dense<0.000000e+00> : vector<64x128xf32>
    %47 = tpu.matmul %45, %46, %cst_59 {dimension_numbers = #tpu.dot_dimension_numbers<[1], [0], [0], [1], [0, 0, 1, 1], [], []>} : vector<64x512xbf16>, vector<512x128xbf16>, vector<64x128xf32> -> vector<64x128xf32>
    %c0_60 = arith.constant 0 : index
    %c0_61 = arith.constant 0 : index
    %48 = vector.load %arg6[%c0_60, %c0_61] : memref<1x128xf32, #tpu.memory_space<vmem>>, vector<1x128xf32>
    %49 = vector.broadcast %48 : vector<1x128xf32> to vector<64x128xf32>
    %50 = arith.addf %47, %49 : vector<64x128xf32>
    %cst_62 = arith.constant 2.000000e-01 : f32
    %51 = vector.broadcast %cst_62 : f32 to vector<64x128xf32>
    %52 = arith.mulf %51, %50 : vector<64x128xf32>
    %53 = arith.maximumf %50, %52 : vector<64x128xf32>
    %54 = vector.shape_cast %53 : vector<64x128xf32> to vector<8x8x128xf32>
    %c0_63 = arith.constant 0 : index
    %c0_64 = arith.constant 0 : index
    %c0_65 = arith.constant 0 : index
    %55 = vector.load %arg8[%c0_63, %c0_64, %c0_65] : memref<8x8x128xf32, #tpu.memory_space<vmem>>, vector<8x8x128xf32>
    tpu.vector_store %arg8[%c0_63, %c0_64, %c0_65], %54 {strides = array<i32>} : memref<8x8x128xf32, #tpu.memory_space<vmem>>, vector<8x8x128xf32>,
    %c0_66 = arith.constant 0 : index
    %c0_67 = arith.constant 0 : index
    %c0_68 = arith.constant 0 : index
    %56 = vector.load %arg7[%c0_66, %c0_67, %c0_68] : memref<1x8x128xf32, #tpu.memory_space<vmem>>, vector<1x8x128xf32>
    %57 = vector.broadcast %56 : vector<1x8x128xf32> to vector<8x8x128xf32>
    %58 = arith.mulf %54, %57 : vector<8x8x128xf32>
    %cst_69 = arith.constant dense<0.000000e+00> : vector<8x8xf32>
    %59 = vector.multi_reduction <add>, %58, %cst_69 [2] : vector<8x8x128xf32> to vector<8x8xf32>
    %60 = vector.shape_cast %59 : vector<8x8xf32> to vector<8x8x1xf32>
    %cst_70 = arith.constant dense<0.000000e+00> : vector<8x1xf32>
    %61 = vector.multi_reduction <add>, %60, %cst_70 [1] : vector<8x8x1xf32> to vector<8x1xf32>
    %62 = vector.shape_cast %61 : vector<8x1xf32> to vector<8x1x1xf32>
    %63 = math.absf %62 : vector<8x1x1xf32>
    %cst_71 = arith.constant 0.000000e+00 : f32
    %64 = vector.broadcast %cst_71 : f32 to vector<8x1x1xf32>
    %65 = arith.subf %64, %63 : vector<8x1x1xf32>
    %66 = math.exp %65 : vector<8x1x1xf32>
    %cst_72 = arith.constant 0.000000e+00 : f32
    %67 = vector.broadcast %cst_72 : f32 to vector<8x1x1xf32>
    %68 = arith.cmpf oge, %62, %67 : vector<8x1x1xf32>
    %cst_73 = arith.constant 1.000000e+00 : f32
    %69 = vector.broadcast %cst_73 : f32 to vector<8x1x1xf32>
    %70 = arith.addf %69, %66 : vector<8x1x1xf32>
    %cst_74 = arith.constant 1.000000e+00 : f32
    %71 = vector.broadcast %cst_74 : f32 to vector<8x1x1xf32>
    %72 = arith.divf %71, %70 : vector<8x1x1xf32>
    %cst_75 = arith.constant 1.000000e+00 : f32
    %73 = vector.broadcast %cst_75 : f32 to vector<8x1x1xf32>
    %74 = arith.addf %73, %66 : vector<8x1x1xf32>
    %75 = arith.divf %66, %74 : vector<8x1x1xf32>
    %76 = arith.select %68, %72, %75 : vector<8x1x1xi1>, vector<8x1x1xf32>
    %c0_76 = arith.constant 0 : index
    %c0_77 = arith.constant 0 : index
    %c0_78 = arith.constant 0 : index
    %77 = vector.load %arg9[%c0_76, %c0_77, %c0_78] : memref<8x1x1xf32, #tpu.memory_space<vmem>>, vector<8x1x1xf32>
    tpu.vector_store %arg9[%c0_76, %c0_77, %c0_78], %76 {strides = array<i32>} : memref<8x1x1xf32, #tpu.memory_space<vmem>>, vector<8x1x1xf32>,
    return
  }
  func.func @transform_0(%arg0: i32) -> (i32, i32, i32) {
    %c0_i32 = arith.constant 0 : i32
    %c0_i32_0 = arith.constant 0 : i32
    %c0_i32_1 = arith.constant 0 : i32
    return %arg0, %c0_i32, %c0_i32_0 : i32, i32, i32
  }
  func.func @transform_1(%arg0: i32) -> (i32, i32) {
    %c0_i32 = arith.constant 0 : i32
    %c0_i32_0 = arith.constant 0 : i32
    %c0_i32_1 = arith.constant 0 : i32
    return %c0_i32, %c0_i32_0 : i32, i32
  }
  func.func @transform_2(%arg0: i32) -> (i32, i32) {
    %c0_i32 = arith.constant 0 : i32
    %c0_i32_0 = arith.constant 0 : i32
    %c0_i32_1 = arith.constant 0 : i32
    return %c0_i32, %c0_i32_0 : i32, i32
  }
  func.func @transform_3(%arg0: i32) -> (i32, i32) {
    %c0_i32 = arith.constant 0 : i32
    %c0_i32_0 = arith.constant 0 : i32
    %c0_i32_1 = arith.constant 0 : i32
    return %c0_i32, %c0_i32_0 : i32, i32
  }
  func.func @transform_4(%arg0: i32) -> (i32, i32) {
    %c0_i32 = arith.constant 0 : i32
    %c0_i32_0 = arith.constant 0 : i32
    %c0_i32_1 = arith.constant 0 : i32
    return %c0_i32, %c0_i32_0 : i32, i32
  }
  func.func @transform_5(%arg0: i32) -> (i32, i32) {
    %c0_i32 = arith.constant 0 : i32
    %c0_i32_0 = arith.constant 0 : i32
    %c0_i32_1 = arith.constant 0 : i32
    return %c0_i32, %c0_i32_0 : i32, i32
  }
  func.func @transform_6(%arg0: i32) -> (i32, i32, i32) {
    %c0_i32 = arith.constant 0 : i32
    %c0_i32_0 = arith.constant 0 : i32
    %c0_i32_1 = arith.constant 0 : i32
    %c0_i32_2 = arith.constant 0 : i32
    return %c0_i32, %c0_i32_0, %c0_i32_1 : i32, i32, i32
  }
  func.func @transform_7(%arg0: i32) -> (i32, i32, i32) {
    %c0_i32 = arith.constant 0 : i32
    %c0_i32_0 = arith.constant 0 : i32
    %c0_i32_1 = arith.constant 0 : i32
    return %arg0, %c0_i32, %c0_i32_0 : i32, i32, i32
  }
  func.func @transform_8(%arg0: i32) -> (i32, i32, i32) {
    %c0_i32 = arith.constant 0 : i32
    %c0_i32_0 = arith.constant 0 : i32
    %c0_i32_1 = arith.constant 0 : i32
    return %arg0, %c0_i32, %c0_i32_0 : i32, i32, i32
  }
}

</mosaic_0001>

<llo_original>
// kernel: tile.13
$region0: #{tile.13}
  #allocation0 [shape = 's32[1]{0}', space=sflag, size = 0x4, scoped, tag = 'scoped memory for tile.13']
  %s0 = inlined_call_operand.vmem [shape: f32[16], index: 0, kind: input, shape index: {}]
  %s1 = inlined_call_operand.vmem [shape: f32[8,16], index: 1, kind: output, shape index: {}]
  // Predicated region
  $region2: #{tile.13} parent=0 // pred_check
    _
  $region3: #{tile.13} parent=0 // pred_check_branch
    %3 = sbr.rel (0) target = $region5
  $region4: #{tile.13} parent=0 // pred_region
    _
  $region5: #{tile.13} parent=0 // pred_fallthru
    _
  %v4 = vld [vmem:[%s0] ss:$0 sm:$0xff]
  %5 = vst [vmem:[%s1] sm:$0xff] %v4

// kernel: tile.14
$region0: #{tile.14}
  %s0 = inlined_call_operand.vmem [shape: f32[8,16], index: 0, kind: input, shape index: {}]
  %s1 = inlined_call_operand.vmem [shape: f32[1,128], index: 1, kind: output, shape index: {}]
  $region1: #{tile.14} parent=0
    #allocation0 [shape = 'u8[4096]{0}', space=vmem, size = 0x1000, scoped, tag = 'scoped mem for output reshape']
    %v2 = vld [vmem:[%s0] sm:$0x1]
    %vm3 = vcmask 130048
    %4 = vst.msk [vmem:[#allocation0] sm:$0x1] %vm3, %v2
    %s5 = scalar_lea.vmem %s0, 7
    %v6 = vld [vmem:[%s5] sm:$0x1]
    %7 = vrot.lane.b32.xlu0 %v6, 112
    %v8 = vpop.permute.xlu0 %7
    %vm9 = vcmask 1048448
    %10 = vst.msk [vmem:[#allocation0] sm:$0x1] %vm9, %v8
    %s11 = scalar_lea.vmem %s0, 6
    %v12 = vld [vmem:[%s11] sm:$0x1]
    %13 = vrot.lane.b32.xlu0 %v12, 96
    %v14 = vpop.permute.xlu0 %13
    %vm15 = vcmask 917248
    %16 = vst.msk [vmem:[#allocation0] sm:$0x1] %vm15, %v14
    %s17 = scalar_lea.vmem %s0, 5
    %v18 = vld [vmem:[%s17] sm:$0x1]
    %19 = vrot.lane.b32.xlu0 %v18, 80
    %v20 = vpop.permute.xlu0 %19
    %vm21 = vcmask 786048
    %22 = vst.msk [vmem:[#allocation0] sm:$0x1] %vm21, %v20
    %s23 = scalar_lea.vmem %s0, 4
    %v24 = vld [vmem:[%s23] sm:$0x1]
    %25 = vrot.lane.b32.xlu0 %v24, 64
    %v26 = vpop.permute.xlu0 %25
    %vm27 = vcmask 654848
    %28 = vst.msk [vmem:[#allocation0] sm:$0x1] %vm27, %v26
    %s29 = scalar_lea.vmem %s0, 3
    %v30 = vld [vmem:[%s29] sm:$0x1]
    %31 = vrot.lane.b32.xlu0 %v30, 48
    %v32 = vpop.permute.xlu0 %31
    %vm33 = vcmask 523648
    %34 = vst.msk [vmem:[#allocation0] sm:$0x1] %vm33, %v32
    %s35 = scalar_lea.vmem %s0, 2
    %v36 = vld [vmem:[%s35] sm:$0x1]
    %37 = vrot.lane.b32.xlu0 %v36, 32
    %v38 = vpop.permute.xlu0 %37
    %vm39 = vcmask 392448
    %40 = vst.msk [vmem:[#allocation0] sm:$0x1] %vm39, %v38
    %s41 = scalar_lea.vmem %s0, 1
    %v42 = vld [vmem:[%s41] sm:$0x1]
    %43 = vrot.lane.b32.xlu0 %v42, 16
    %v44 = vpop.permute.xlu0 %43
    %vm45 = vcmask 261248
    %46 = vst.msk [vmem:[#allocation0] sm:$0x1] %vm45, %v44
    %s48 = sshllo.u32 0, 1
    %v50 = vld [vmem:[#allocation0] sm:%s48]
    %s51 = sshllo.u32 0, 1
    %52 = vst [vmem:[%s1] sm:%s51] %v50

// kernel: tile.18
$region0: #{tile.18}
  #allocation0 [shape = 's32[1]{0}', space=sflag, size = 0x4, scoped, tag = 'scoped memory for tile.18']
  %s0 = inlined_call_operand.vmem [shape: f32[32], index: 0, kind: input, shape index: {}]
  %s1 = inlined_call_operand.vmem [shape: f32[4,32], index: 1, kind: output, shape index: {}]
  // Predicated region
  $region2: #{tile.18} parent=0 // pred_check
    _
  $region3: #{tile.18} parent=0 // pred_check_branch
    %3 = sbr.rel (0) target = $region5
  $region4: #{tile.18} parent=0 // pred_region
    _
  $region5: #{tile.18} parent=0 // pred_fallthru
    _
  %v4 = vld [vmem:[%s0] ss:$0 sm:$0xff]
  %5 = vst [vmem:[%s1] sm:$0xf] %v4

// kernel: tile.19
$region0: #{tile.19}
  %s0 = inlined_call_operand.vmem [shape: f32[4,32], index: 0, kind: input, shape index: {}]
  %s1 = inlined_call_operand.vmem [shape: f32[1,128], index: 1, kind: output, shape index: {}]
  $region1: #{tile.19} parent=0
    #allocation0 [shape = 'u8[4096]{0}', space=vmem, size = 0x1000, scoped, tag = 'scoped mem for output reshape']
    #allocation1 [shape = 'u8[4096]{0}', space=vmem, size = 0x1000, scoped, tag = 'scoped mem for input reshape']
    %s3 = sshllo.u32 0, 4
    %v4 = vld [vmem:[%s0] sm:%s3]
    %5 = vst [vmem:[#allocation1] sm:%s3] %v4
    %v6 = vld [vmem:[#allocation1] sm:$0x1]
    %vm7 = vcmask 261120
    %8 = vst.msk [vmem:[#allocation0] sm:$0x1] %vm7, %v6
    %s9 = scalar_lea.vmem [#allocation1], 3
    %v10 = vld [vmem:[%s9] sm:$0x1]
    %11 = vrot.lane.b32.xlu0 %v10, 96
    %v12 = vpop.permute.xlu0 %11
    %vm13 = vcmask 1048320
    %14 = vst.msk [vmem:[#allocation0] sm:$0x1] %vm13, %v12
    %s15 = scalar_lea.vmem [#allocation1], 2
    %v16 = vld [vmem:[%s15] sm:$0x1]
    %17 = vrot.lane.b32.xlu0 %v16, 64
    %v18 = vpop.permute.xlu0 %17
    %vm19 = vcmask 785920
    %20 = vst.msk [vmem:[#allocation0] sm:$0x1] %vm19, %v18
    %s21 = scalar_lea.vmem [#allocation1], 1
    %v22 = vld [vmem:[%s21] sm:$0x1]
    %23 = vrot.lane.b32.xlu0 %v22, 32
    %v24 = vpop.permute.xlu0 %23
    %vm25 = vcmask 523520
    %26 = vst.msk [vmem:[#allocation0] sm:$0x1] %vm25, %v24
    %s28 = sshllo.u32 0, 1
    %v30 = vld [vmem:[#allocation0] sm:%s28]
    %s31 = sshllo.u32 0, 1
    %32 = vst [vmem:[%s1] sm:%s31] %v30

// kernel: discriminator_forward.1
$region0: #{discriminator_forward.1}
  #allocation0 [shape = 'u32[]', space=smem, size = 0x4, offset = 0x4, fixed_abs, tag = 'smem constant byte address 0x4 - core index']
  #allocation1 [shape = 'u32[144,128]{1,0:T(1,128)}', space=vmem, size = 0x12000, scoped, tag = 'internal scratch']
  #allocation2 [shape = 'f32[8,32,128]{2,1,0:T(8,128)}', space=vmem, size = 0x20000, scoped, tag = 'scratch operand']
  #allocation3 [shape = 'f32[8,32,128]{2,1,0:T(8,128)}', space=vmem, size = 0x20000, scoped, tag = 'scratch operand']
  %s0 = inlined_call_operand.vmem [shape: f32[8,34,128], index: 0, kind: input, shape index: {}]
  %s1 = inlined_call_operand.vmem [shape: bf16[512,128], index: 1, kind: input, shape index: {}]
  %s2 = inlined_call_operand.vmem [shape: bf16[512,128], index: 2, kind: input, shape index: {}]
  %s3 = inlined_call_operand.vmem [shape: f32[1,128], index: 3, kind: input, shape index: {}]
  %s4 = inlined_call_operand.vmem [shape: bf16[512,128], index: 4, kind: input, shape index: {}]
  %s5 = inlined_call_operand.vmem [shape: f32[1,128], index: 5, kind: input, shape index: {}]
  %s6 = inlined_call_operand.vmem [shape: f32[1,8,128], index: 6, kind: input, shape index: {}]
  %s7 = inlined_call_operand.vmem [shape: f32[8,8,128], index: 7, kind: output, shape index: {0}]
  %s8 = inlined_call_operand.vmem [shape: f32[8,1,1], index: 8, kind: output, shape index: {1}]
  %9 = xla_tuple %s7, %s8
  %s10 = sld [smem:[#allocation0]]
  $region46: #{discriminator_forward.1} parent=0
    _
  %s12 = ssub.s32 1, %s10
  %s13 = scalar_select 0, %s12, %s10
  // Predicated region
  $region2: #{discriminator_forward.1} parent=0 // pred_check
    _
  $region3: #{discriminator_forward.1} parent=0 // pred_check_branch
    %15 = sbr.rel (0) target = $region5
  $region4: #{discriminator_forward.1} parent=0 // pred_region
    _
  $region5: #{discriminator_forward.1} parent=0 // pred_fallthru
    _
  // Predicated region
  $region6: #{discriminator_forward.1} parent=0 // pred_check
    _
  $region7: #{discriminator_forward.1} parent=0 // pred_check_branch
    %17 = sbr.rel (0) target = $region9
  $region8: #{discriminator_forward.1} parent=0 // pred_region
    _
  $region9: #{discriminator_forward.1} parent=0 // pred_fallthru
    _
  // Predicated region
  $region10: #{discriminator_forward.1} parent=0 // pred_check
    _
  $region11: #{discriminator_forward.1} parent=0 // pred_check_branch
    %19 = sbr.rel (0) target = $region13
  $region12: #{discriminator_forward.1} parent=0 // pred_region
    _
  $region13: #{discriminator_forward.1} parent=0 // pred_fallthru
    _
  // Predicated region
  $region14: #{discriminator_forward.1} parent=0 // pred_check
    _
  $region15: #{discriminator_forward.1} parent=0 // pred_check_branch
    %21 = sbr.rel (0) target = $region17
  $region16: #{discriminator_forward.1} parent=0 // pred_region
    _
  $region17: #{discriminator_forward.1} parent=0 // pred_fallthru
    _
  // Predicated region
  $region18: #{discriminator_forward.1} parent=0 // pred_check
    _
  $region19: #{discriminator_forward.1} parent=0 // pred_check_branch
    %23 = sbr.rel (0) target = $region21
  $region20: #{discriminator_forward.1} parent=0 // pred_region
    _
  $region21: #{discriminator_forward.1} parent=0 // pred_fallthru
    _
  // Predicated region
  $region22: #{discriminator_forward.1} parent=0 // pred_check
    _
  $region23: #{discriminator_forward.1} parent=0 // pred_check_branch
    %25 = sbr.rel (0) target = $region25
  $region24: #{discriminator_forward.1} parent=0 // pred_region
    _
  $region25: #{discriminator_forward.1} parent=0 // pred_fallthru
    _
  // Predicated region
  $region26: #{discriminator_forward.1} parent=0 // pred_check
    _
  $region27: #{discriminator_forward.1} parent=0 // pred_check_branch
    %27 = sbr.rel (0) target = $region29
  $region28: #{discriminator_forward.1} parent=0 // pred_region
    _
  $region29: #{discriminator_forward.1} parent=0 // pred_fallthru
    _
  %v29 = vld [vmem:[%s0] ss:$2 sm:$0xff]
  %s30 = scalar_lea.vmem %s0, 16
  %v31 = vld [vmem:[%s30] ss:$2 sm:$0xff]
  %s32 = scalar_lea.vmem %s0, 40
  %v33 = vld [vmem:[%s32] ss:$2 sm:$0xff]
  %s34 = scalar_lea.vmem %s0, 56
  %v35 = vld [vmem:[%s34] ss:$2 sm:$0xff]
  %s36 = scalar_lea.vmem %s0, 80
  %v37 = vld [vmem:[%s36] ss:$2 sm:$0xff]
  %s38 = scalar_lea.vmem %s0, 96
  %v39 = vld [vmem:[%s38] ss:$2 sm:$0xff]
  %s40 = scalar_lea.vmem %s0, 120
  %v41 = vld [vmem:[%s40] ss:$2 sm:$0xff]
  %s42 = scalar_lea.vmem %s0, 136
  %v43 = vld [vmem:[%s42] ss:$2 sm:$0xff]
  %s44 = scalar_lea.vmem %s0, 160
  %v45 = vld [vmem:[%s44] ss:$2 sm:$0xff]
  %s46 = scalar_lea.vmem %s0, 176
  %v47 = vld [vmem:[%s46] ss:$2 sm:$0xff]
  %s48 = scalar_lea.vmem %s0, 200
  %v49 = vld [vmem:[%s48] ss:$2 sm:$0xff]
  %s50 = scalar_lea.vmem %s0, 216
  %v51 = vld [vmem:[%s50] ss:$2 sm:$0xff]
  %s52 = scalar_lea.vmem %s0, 240
  %v53 = vld [vmem:[%s52] ss:$2 sm:$0xff]
  %s54 = scalar_lea.vmem %s0, 256
  %v55 = vld [vmem:[%s54] ss:$2 sm:$0xff]
  %s56 = scalar_lea.vmem %s0, 280
  %v57 = vld [vmem:[%s56] ss:$2 sm:$0xff]
  %s58 = scalar_lea.vmem %s0, 296
  %v59 = vld [vmem:[%s58] ss:$2 sm:$0xff]
  %s60 = scalar_lea.vmem %s0, 1
  %v61 = vld [vmem:[%s60] ss:$2 sm:$0xff]
  %s62 = scalar_lea.vmem %s0, 17
  %v63 = vld [vmem:[%s62] ss:$2 sm:$0xff]
  %s64 = scalar_lea.vmem %s0, 41
  %v65 = vld [vmem:[%s64] ss:$2 sm:$0xff]
  %s66 = scalar_lea.vmem %s0, 57
  %v67 = vld [vmem:[%s66] ss:$2 sm:$0xff]
  %s68 = scalar_lea.vmem %s0, 81
  %v69 = vld [vmem:[%s68] ss:$2 sm:$0xff]
  %s70 = scalar_lea.vmem %s0, 97
  %v71 = vld [vmem:[%s70] ss:$2 sm:$0xff]
  %s72 = scalar_lea.vmem %s0, 121
  %v73 = vld [vmem:[%s72] ss:$2 sm:$0xff]
  %s74 = scalar_lea.vmem %s0, 137
  %v75 = vld [vmem:[%s74] ss:$2 sm:$0xff]
  %s76 = scalar_lea.vmem %s0, 161
  %v77 = vld [vmem:[%s76] ss:$2 sm:$0xff]
  %s78 = scalar_lea.vmem %s0, 177
  %v79 = vld [vmem:[%s78] ss:$2 sm:$0xff]
  %s80 = scalar_lea.vmem %s0, 201
  %v81 = vld [vmem:[%s80] ss:$2 sm:$0xff]
  %s82 = scalar_lea.vmem %s0, 217
  %v83 = vld [vmem:[%s82] ss:$2 sm:$0xff]
  %s84 = scalar_lea.vmem %s0, 241
  %v85 = vld [vmem:[%s84] ss:$2 sm:$0xff]
  %s86 = scalar_lea.vmem %s0, 257
  %v87 = vld [vmem:[%s86] ss:$2 sm:$0xff]
  %s88 = scalar_lea.vmem %s0, 281
  %v89 = vld [vmem:[%s88] ss:$2 sm:$0xff]
  %s90 = scalar_lea.vmem %s0, 297
  %v91 = vld [vmem:[%s90] ss:$2 sm:$0xff]
  %s92 = scalar_lea.vmem %s0, 2
  %v93 = vld [vmem:[%s92] ss:$2 sm:$0xff]
  %s94 = scalar_lea.vmem %s0, 18
  %v95 = vld [vmem:[%s94] ss:$2 sm:$0xff]
  %s96 = scalar_lea.vmem %s0, 42
  %v97 = vld [vmem:[%s96] ss:$2 sm:$0xff]
  %s98 = scalar_lea.vmem %s0, 58
  %v99 = vld [vmem:[%s98] ss:$2 sm:$0xff]
  %s100 = scalar_lea.vmem %s0, 82
  %v101 = vld [vmem:[%s100] ss:$2 sm:$0xff]
  %s102 = scalar_lea.vmem %s0, 98
  %v103 = vld [vmem:[%s102] ss:$2 sm:$0xff]
  %s104 = scalar_lea.vmem %s0, 122
  %v105 = vld [vmem:[%s104] ss:$2 sm:$0xff]
  %s106 = scalar_lea.vmem %s0, 138
  %v107 = vld [vmem:[%s106] ss:$2 sm:$0xff]
  %s108 = scalar_lea.vmem %s0, 162
  %v109 = vld [vmem:[%s108] ss:$2 sm:$0xff]
  %s110 = scalar_lea.vmem %s0, 178
  %v111 = vld [vmem:[%s110] ss:$2 sm:$0xff]
  %s112 = scalar_lea.vmem %s0, 202
  %v113 = vld [vmem:[%s112] ss:$2 sm:$0xff]
  %s114 = scalar_lea.vmem %s0, 218
  %v115 = vld [vmem:[%s114] ss:$2 sm:$0xff]
  %s116 = scalar_lea.vmem %s0, 242
  %v117 = vld [vmem:[%s116] ss:$2 sm:$0xff]
  %s118 = scalar_lea.vmem %s0, 258
  %v119 = vld [vmem:[%s118] ss:$2 sm:$0xff]
  %s120 = scalar_lea.vmem %s0, 282
  %v121 = vld [vmem:[%s120] ss:$2 sm:$0xff]
  %s122 = scalar_lea.vmem %s0, 298
  %v123 = vld [vmem:[%s122] ss:$2 sm:$0xff]
  %s124 = scalar_lea.vmem %s0, 3
  %v125 = vld [vmem:[%s124] ss:$2 sm:$0xff]
  %s126 = scalar_lea.vmem %s0, 19
  %v127 = vld [vmem:[%s126] ss:$2 sm:$0xff]
  %s128 = scalar_lea.vmem %s0, 43
  %v129 = vld [vmem:[%s128] ss:$2 sm:$0xff]
  %s130 = scalar_lea.vmem %s0, 59
  %v131 = vld [vmem:[%s130] ss:$2 sm:$0xff]
  %s132 = scalar_lea.vmem %s0, 83
  %v133 = vld [vmem:[%s132] ss:$2 sm:$0xff]
  %s134 = scalar_lea.vmem %s0, 99
  %v135 = vld [vmem:[%s134] ss:$2 sm:$0xff]
  %s136 = scalar_lea.vmem %s0, 123
  %v137 = vld [vmem:[%s136] ss:$2 sm:$0xff]
  %s138 = scalar_lea.vmem %s0, 139
  %v139 = vld [vmem:[%s138] ss:$2 sm:$0xff]
  %s140 = scalar_lea.vmem %s0, 163
  %v141 = vld [vmem:[%s140] ss:$2 sm:$0xff]
  %s142 = scalar_lea.vmem %s0, 179
  %v143 = vld [vmem:[%s142] ss:$2 sm:$0xff]
  %s144 = scalar_lea.vmem %s0, 203
  %v145 = vld [vmem:[%s144] ss:$2 sm:$0xff]
  %s146 = scalar_lea.vmem %s0, 219
  %v147 = vld [vmem:[%s146] ss:$2 sm:$0xff]
  %s148 = scalar_lea.vmem %s0, 243
  %v149 = vld [vmem:[%s148] ss:$2 sm:$0xff]
  %s150 = scalar_lea.vmem %s0, 259
  %v151 = vld [vmem:[%s150] ss:$2 sm:$0xff]
  %s152 = scalar_lea.vmem %s0, 283
  %v153 = vld [vmem:[%s152] ss:$2 sm:$0xff]
  %s154 = scalar_lea.vmem %s0, 299
  %v155 = vld [vmem:[%s154] ss:$2 sm:$0xff]
  %v156 = vpack.c.bf16 %v31, %v29
  %v157 = vpack.c.bf16 %v63, %v61
  %v158 = vpack.c.bf16 %v95, %v93
  %v159 = vpack.c.bf16 %v127, %v125
  %v160 = vpack.c.bf16 %v35, %v33
  %v161 = vpack.c.bf16 %v67, %v65
  %v162 = vpack.c.bf16 %v99, %v97
  %v163 = vpack.c.bf16 %v131, %v129
  %v164 = vpack.c.bf16 %v39, %v37
  %v165 = vpack.c.bf16 %v71, %v69
  %v166 = vpack.c.bf16 %v103, %v101
  %v167 = vpack.c.bf16 %v135, %v133
  %v168 = vpack.c.bf16 %v43, %v41
  %v169 = vpack.c.bf16 %v75, %v73
  %v170 = vpack.c.bf16 %v107, %v105
  %v171 = vpack.c.bf16 %v139, %v137
  %v172 = vpack.c.bf16 %v47, %v45
  %v173 = vpack.c.bf16 %v79, %v77
  %v174 = vpack.c.bf16 %v111, %v109
  %v175 = vpack.c.bf16 %v143, %v141
  %v176 = vpack.c.bf16 %v51, %v49
  %v177 = vpack.c.bf16 %v83, %v81
  %v178 = vpack.c.bf16 %v115, %v113
  %v179 = vpack.c.bf16 %v147, %v145
  %v180 = vpack.c.bf16 %v55, %v53
  %v181 = vpack.c.bf16 %v87, %v85
  %v182 = vpack.c.bf16 %v119, %v117
  %v183 = vpack.c.bf16 %v151, %v149
  %v184 = vpack.c.bf16 %v59, %v57
  %v185 = vpack.c.bf16 %v91, %v89
  %v186 = vpack.c.bf16 %v123, %v121
  %v187 = vpack.c.bf16 %v155, %v153
  %v188 = vld [vmem:[%s1] sm:$0xf]
  %v189 = vld [vmem:[%s1 + $0x4] sm:$0xf]
  %v190 = vld [vmem:[%s1 + $0x8] sm:$0xf]
  %v191 = vld [vmem:[%s1 + $0xc] sm:$0xf]
  %v192 = vld [vmem:[%s1 + $0x10] sm:$0xf]
  %v193 = vld [vmem:[%s1 + $0x14] sm:$0xf]
  %v194 = vld [vmem:[%s1 + $0x18] sm:$0xf]
  %v195 = vld [vmem:[%s1 + $0x1c] sm:$0xf]
  %v196 = vld [vmem:[%s1 + $0x20] sm:$0xf]
  %v197 = vld [vmem:[%s1 + $0x24] sm:$0xf]
  %v198 = vld [vmem:[%s1 + $0x28] sm:$0xf]
  %v199 = vld [vmem:[%s1 + $0x2c] sm:$0xf]
  %v200 = vld [vmem:[%s1 + $0x30] sm:$0xf]
  %v201 = vld [vmem:[%s1 + $0x34] sm:$0xf]
  %v202 = vld [vmem:[%s1 + $0x38] sm:$0xf]
  %v203 = vld [vmem:[%s1 + $0x3c] sm:$0xf]
  %v204 = vld [vmem:[%s1 + $0x40] sm:$0xf]
  %v205 = vld [vmem:[%s1 + $0x44] sm:$0xf]
  %v206 = vld [vmem:[%s1 + $0x48] sm:$0xf]
  %v207 = vld [vmem:[%s1 + $0x4c] sm:$0xf]
  %v208 = vld [vmem:[%s1 + $0x50] sm:$0xf]
  %v209 = vld [vmem:[%s1 + $0x54] sm:$0xf]
  %v210 = vld [vmem:[%s1 + $0x58] sm:$0xf]
  %v211 = vld [vmem:[%s1 + $0x5c] sm:$0xf]
  %v212 = vld [vmem:[%s1 + $0x60] sm:$0xf]
  %v213 = vld [vmem:[%s1 + $0x64] sm:$0xf]
  %v214 = vld [vmem:[%s1 + $0x68] sm:$0xf]
  %v215 = vld [vmem:[%s1 + $0x6c] sm:$0xf]
  %v216 = vld [vmem:[%s1 + $0x70] sm:$0xf]
  %v217 = vld [vmem:[%s1 + $0x74] sm:$0xf]
  %v218 = vld [vmem:[%s1 + $0x78] sm:$0xf]
  %v219 = vld [vmem:[%s1 + $0x7c] sm:$0xf]
  %v220 = vld [vmem:[%s1 + $0x80] sm:$0xf]
  %v221 = vld [vmem:[%s1 + $0x84] sm:$0xf]
  %v222 = vld [vmem:[%s1 + $0x88] sm:$0xf]
  %v223 = vld [vmem:[%s1 + $0x8c] sm:$0xf]
  %v224 = vld [vmem:[%s1 + $0x90] sm:$0xf]
  %v225 = vld [vmem:[%s1 + $0x94] sm:$0xf]
  %v226 = vld [vmem:[%s1 + $0x98] sm:$0xf]
  %v227 = vld [vmem:[%s1 + $0x9c] sm:$0xf]
  %v228 = vld [vmem:[%s1 + $0xa0] sm:$0xf]
  %v229 = vld [vmem:[%s1 + $0xa4] sm:$0xf]
  %v230 = vld [vmem:[%s1 + $0xa8] sm:$0xf]
  %v231 = vld [vmem:[%s1 + $0xac] sm:$0xf]
  %v232 = vld [vmem:[%s1 + $0xb0] sm:$0xf]
  %v233 = vld [vmem:[%s1 + $0xb4] sm:$0xf]
  %v234 = vld [vmem:[%s1 + $0xb8] sm:$0xf]
  %v235 = vld [vmem:[%s1 + $0xbc] sm:$0xf]
  %v236 = vld [vmem:[%s1 + $0xc0] sm:$0xf]
  %v237 = vld [vmem:[%s1 + $0xc4] sm:$0xf]
  %v238 = vld [vmem:[%s1 + $0xc8] sm:$0xf]
  %v239 = vld [vmem:[%s1 + $0xcc] sm:$0xf]
  %v240 = vld [vmem:[%s1 + $0xd0] sm:$0xf]
  %v241 = vld [vmem:[%s1 + $0xd4] sm:$0xf]
  %v242 = vld [vmem:[%s1 + $0xd8] sm:$0xf]
  %v243 = vld [vmem:[%s1 + $0xdc] sm:$0xf]
  %v244 = vld [vmem:[%s1 + $0xe0] sm:$0xf]
  %v245 = vld [vmem:[%s1 + $0xe4] sm:$0xf]
  %v246 = vld [vmem:[%s1 + $0xe8] sm:$0xf]
  %v247 = vld [vmem:[%s1 + $0xec] sm:$0xf]
  %v248 = vld [vmem:[%s1 + $0xf0] sm:$0xf]
  %v249 = vld [vmem:[%s1 + $0xf4] sm:$0xf]
  %v250 = vld [vmem:[%s1 + $0xf8] sm:$0xf]
  %v251 = vld [vmem:[%s1 + $0xfc] sm:$0xf]
  %v316 = vunpack.c.l.b16 %v188
  %v317 = vunpack.c.l.b16 %v189
  %v318 = vunpack.c.l.b16 %v190
  %v319 = vunpack.c.l.b16 %v191
  %v320 = vunpack.c.l.b16 %v192
  %v321 = vunpack.c.l.b16 %v193
  %v322 = vunpack.c.l.b16 %v194
  %v323 = vunpack.c.l.b16 %v195
  %v324 = vunpack.c.l.b16 %v196
  %v325 = vunpack.c.l.b16 %v197
  %v326 = vunpack.c.l.b16 %v198
  %v327 = vunpack.c.l.b16 %v199
  %v328 = vunpack.c.l.b16 %v200
  %v329 = vunpack.c.l.b16 %v201
  %v330 = vunpack.c.l.b16 %v202
  %v331 = vunpack.c.l.b16 %v203
  %v332 = vunpack.c.l.b16 %v204
  %v333 = vunpack.c.l.b16 %v205
  %v334 = vunpack.c.l.b16 %v206
  %v335 = vunpack.c.l.b16 %v207
  %v336 = vunpack.c.l.b16 %v208
  %v337 = vunpack.c.l.b16 %v209
  %v338 = vunpack.c.l.b16 %v210
  %v339 = vunpack.c.l.b16 %v211
  %v340 = vunpack.c.l.b16 %v212
  %v341 = vunpack.c.l.b16 %v213
  %v342 = vunpack.c.l.b16 %v214
  %v343 = vunpack.c.l.b16 %v215
  %v344 = vunpack.c.l.b16 %v216
  %v345 = vunpack.c.l.b16 %v217
  %v346 = vunpack.c.l.b16 %v218
  %v347 = vunpack.c.l.b16 %v219
  %v348 = vunpack.c.l.b16 %v220
  %v349 = vunpack.c.l.b16 %v221
  %v350 = vunpack.c.l.b16 %v222
  %v351 = vunpack.c.l.b16 %v223
  %v352 = vunpack.c.l.b16 %v224
  %v353 = vunpack.c.l.b16 %v225
  %v354 = vunpack.c.l.b16 %v226
  %v355 = vunpack.c.l.b16 %v227
  %v356 = vunpack.c.l.b16 %v228
  %v357 = vunpack.c.l.b16 %v229
  %v358 = vunpack.c.l.b16 %v230
  %v359 = vunpack.c.l.b16 %v231
  %v360 = vunpack.c.l.b16 %v232
  %v361 = vunpack.c.l.b16 %v233
  %v362 = vunpack.c.l.b16 %v234
  %v363 = vunpack.c.l.b16 %v235
  %v364 = vunpack.c.l.b16 %v236
  %v365 = vunpack.c.l.b16 %v237
  %v366 = vunpack.c.l.b16 %v238
  %v367 = vunpack.c.l.b16 %v239
  %v368 = vunpack.c.l.b16 %v240
  %v369 = vunpack.c.l.b16 %v241
  %v370 = vunpack.c.l.b16 %v242
  %v371 = vunpack.c.l.b16 %v243
  %v372 = vunpack.c.l.b16 %v244
  %v373 = vunpack.c.l.b16 %v245
  %v374 = vunpack.c.l.b16 %v246
  %v375 = vunpack.c.l.b16 %v247
  %v376 = vunpack.c.l.b16 %v248
  %v377 = vunpack.c.l.b16 %v249
  %v378 = vunpack.c.l.b16 %v250
  %v379 = vunpack.c.l.b16 %v251
  %v380 = vpack.c.b16 %v317, %v316
  %v381 = vpack.c.b16 %v319, %v318
  %v382 = vpack.c.b16 %v321, %v320
  %v383 = vpack.c.b16 %v323, %v322
  %v384 = vpack.c.b16 %v325, %v324
  %v385 = vpack.c.b16 %v327, %v326
  %v386 = vpack.c.b16 %v329, %v328
  %v387 = vpack.c.b16 %v331, %v330
  %v388 = vpack.c.b16 %v333, %v332
  %v389 = vpack.c.b16 %v335, %v334
  %v390 = vpack.c.b16 %v337, %v336
  %v391 = vpack.c.b16 %v339, %v338
  %v392 = vpack.c.b16 %v341, %v340
  %v393 = vpack.c.b16 %v343, %v342
  %v394 = vpack.c.b16 %v345, %v344
  %v395 = vpack.c.b16 %v347, %v346
  %v396 = vpack.c.b16 %v349, %v348
  %v397 = vpack.c.b16 %v351, %v350
  %v398 = vpack.c.b16 %v353, %v352
  %v399 = vpack.c.b16 %v355, %v354
  %v400 = vpack.c.b16 %v357, %v356
  %v401 = vpack.c.b16 %v359, %v358
  %v402 = vpack.c.b16 %v361, %v360
  %v403 = vpack.c.b16 %v363, %v362
  %v404 = vpack.c.b16 %v365, %v364
  %v405 = vpack.c.b16 %v367, %v366
  %v406 = vpack.c.b16 %v369, %v368
  %v407 = vpack.c.b16 %v371, %v370
  %v408 = vpack.c.b16 %v373, %v372
  %v409 = vpack.c.b16 %v375, %v374
  %v410 = vpack.c.b16 %v377, %v376
  %v411 = vpack.c.b16 %v379, %v378
  %444 = vmatprep.subr.bf16.mxu0 0
  %445 = vmatpush1.bf16.msra.mxu0 %v380
  %446 = vmatprep.subr.bf16.mxu0 0
  %447 = vmatpush1.bf16.msra.mxu0 %v381
  %448 = vmatprep.subr.bf16.mxu0 0
  %449 = vmatpush1.bf16.msra.mxu0 %v382
  %450 = vmatprep.subr.bf16.mxu0 0
  %451 = vmatpush1.bf16.msra.mxu0 %v383
  %452 = vmatprep.subr.bf16.mxu0 0
  %453 = vmatpush1.bf16.msra.mxu0 %v384
  %454 = vmatprep.subr.bf16.mxu0 0
  %455 = vmatpush1.bf16.msra.mxu0 %v385
  %456 = vmatprep.subr.bf16.mxu0 0
  %457 = vmatpush1.bf16.msra.mxu0 %v386
  %458 = vmatprep.subr.bf16.mxu0 0
  %459 = vmatpush1.bf16.msra.mxu0 %v387
  %460 = vmatprep.subr.bf16.mxu0 0
  %461 = vmatpush1.bf16.msra.mxu0 %v388
  %462 = vmatprep.subr.bf16.mxu0 0
  %463 = vmatpush1.bf16.msra.mxu0 %v389
  %464 = vmatprep.subr.bf16.mxu0 0
  %465 = vmatpush1.bf16.msra.mxu0 %v390
  %466 = vmatprep.subr.bf16.mxu0 0
  %467 = vmatpush1.bf16.msra.mxu0 %v391
  %468 = vmatprep.subr.bf16.mxu0 0
  %469 = vmatpush1.bf16.msra.mxu0 %v392
  %470 = vmatprep.subr.bf16.mxu0 0
  %471 = vmatpush1.bf16.msra.mxu0 %v393
  %472 = vmatprep.subr.bf16.mxu0 0
  %473 = vmatpush1.bf16.msra.mxu0 %v394
  %474 = vmatprep.subr.bf16.mxu0 0
  %475 = vmatpush1.bf16.msra.mxu0 %v395
  %476 = vmatprep.mubr.bf16.mxu0 %v157
  %477 = vmatmul.mubr.bf16.gmra.mrb[0].mxu0 %v156
  %v478 = vpop.f32.mrb[0].mxu0
  %v479 = vadd.f32 0.0, %v478
  %v480 = vpop.f32.mrb[0].mxu0
  %v481 = vpop.f32.mrb[0].mxu0
  %v482 = vadd.f32 0.0, %v481
  %v483 = vpop.f32.mrb[0].mxu0
  %484 = vmatprep.mubr.bf16.mxu0 %v161
  %485 = vmatmul.mubr.bf16.gmra.mrb[0].mxu0 %v160
  %v486 = vpop.f32.mrb[0].mxu0
  %v487 = vadd.f32 0.0, %v486
  %v488 = vpop.f32.mrb[0].mxu0
  %v489 = vpop.f32.mrb[0].mxu0
  %v490 = vadd.f32 0.0, %v489
  %v491 = vpop.f32.mrb[0].mxu0
  %492 = vmatprep.mubr.bf16.mxu0 %v165
  %493 = vmatmul.mubr.bf16.gmra.mrb[0].mxu0 %v164
  %v494 = vpop.f32.mrb[0].mxu0
  %v495 = vadd.f32 0.0, %v494
  %v496 = vpop.f32.mrb[0].mxu0
  %v497 = vpop.f32.mrb[0].mxu0
  %v498 = vadd.f32 0.0, %v497
  %v499 = vpop.f32.mrb[0].mxu0
  %500 = vmatprep.mubr.bf16.mxu0 %v169
  %501 = vmatmul.mubr.bf16.gmra.mrb[0].mxu0 %v168
  %v502 = vpop.f32.mrb[0].mxu0
  %v503 = vadd.f32 0.0, %v502
  %v504 = vpop.f32.mrb[0].mxu0
  %v505 = vpop.f32.mrb[0].mxu0
  %v506 = vadd.f32 0.0, %v505
  %v507 = vpop.f32.mrb[0].mxu0
  %508 = vmatprep.mubr.bf16.mxu0 %v173
  %509 = vmatmul.mubr.bf16.gmra.mrb[0].mxu0 %v172
  %v510 = vpop.f32.mrb[0].mxu0
  %v511 = vadd.f32 0.0, %v510
  %v512 = vpop.f32.mrb[0].mxu0
  %v513 = vpop.f32.mrb[0].mxu0
  %v514 = vadd.f32 0.0, %v513
  %v515 = vpop.f32.mrb[0].mxu0
  %516 = vmatprep.mubr.bf16.mxu0 %v177
  %517 = vmatmul.mubr.bf16.gmra.mrb[0].mxu0 %v176
  %v518 = vpop.f32.mrb[0].mxu0
  %v519 = vadd.f32 0.0, %v518
  %v520 = vpop.f32.mrb[0].mxu0
  %v521 = vpop.f32.mrb[0].mxu0
  %v522 = vadd.f32 0.0, %v521
  %v523 = vpop.f32.mrb[0].mxu0
  %524 = vmatprep.mubr.bf16.mxu0 %v181
  %525 = vmatmul.mubr.bf16.gmra.mrb[0].mxu0 %v180
  %v526 = vpop.f32.mrb[0].mxu0
  %v527 = vadd.f32 0.0, %v526
  %v528 = vpop.f32.mrb[0].mxu0
  %v529 = vpop.f32.mrb[0].mxu0
  %v530 = vadd.f32 0.0, %v529
  %v531 = vpop.f32.mrb[0].mxu0
  %532 = vmatprep.mubr.bf16.mxu0 %v185
  %533 = vmatmul.mubr.bf16.gmra.mrb[0].mxu0 %v184
  %v534 = vpop.f32.mrb[0].mxu0
  %v535 = vadd.f32 0.0, %v534
  %v536 = vpop.f32.mrb[0].mxu0
  %v537 = vpop.f32.mrb[0].mxu0
  %v538 = vadd.f32 0.0, %v537
  %v539 = vpop.f32.mrb[0].mxu0
  %540 = vdwg.mxu0
  %541 = vmatprep.subr.bf16.mxu0 0
  %542 = vmatpush1.bf16.msra.mxu0 %v396
  %543 = vmatprep.subr.bf16.mxu0 0
  %544 = vmatpush1.bf16.msra.mxu0 %v397
  %545 = vmatprep.subr.bf16.mxu0 0
  %546 = vmatpush1.bf16.msra.mxu0 %v398
  %547 = vmatprep.subr.bf16.mxu0 0
  %548 = vmatpush1.bf16.msra.mxu0 %v399
  %549 = vmatprep.subr.bf16.mxu0 0
  %550 = vmatpush1.bf16.msra.mxu0 %v400
  %551 = vmatprep.subr.bf16.mxu0 0
  %552 = vmatpush1.bf16.msra.mxu0 %v401
  %553 = vmatprep.subr.bf16.mxu0 0
  %554 = vmatpush1.bf16.msra.mxu0 %v402
  %555 = vmatprep.subr.bf16.mxu0 0
  %556 = vmatpush1.bf16.msra.mxu0 %v403
  %557 = vmatprep.subr.bf16.mxu0 0
  %558 = vmatpush1.bf16.msra.mxu0 %v404
  %559 = vmatprep.subr.bf16.mxu0 0
  %560 = vmatpush1.bf16.msra.mxu0 %v405
  %561 = vmatprep.subr.bf16.mxu0 0
  %562 = vmatpush1.bf16.msra.mxu0 %v406
  %563 = vmatprep.subr.bf16.mxu0 0
  %564 = vmatpush1.bf16.msra.mxu0 %v407
  %565 = vmatprep.subr.bf16.mxu0 0
  %566 = vmatpush1.bf16.msra.mxu0 %v408
  %567 = vmatprep.subr.bf16.mxu0 0
  %568 = vmatpush1.bf16.msra.mxu0 %v409
  %569 = vmatprep.subr.bf16.mxu0 0
  %570 = vmatpush1.bf16.msra.mxu0 %v410
  %571 = vmatprep.subr.bf16.mxu0 0
  %572 = vmatpush1.bf16.msra.mxu0 %v411
  %573 = vmatprep.mubr.bf16.mxu0 %v159
  %574 = vmatmul.mubr.bf16.gmra.mrb[0].mxu0 %v158
  %v575 = vpop.f32.mrb[0].mxu0
  %v576 = vadd.f32 %v479, %v575
  %v577 = vpop.f32.mrb[0].mxu0
  %v578 = vpop.f32.mrb[0].mxu0
  %v579 = vadd.f32 %v482, %v578
  %v580 = vpop.f32.mrb[0].mxu0
  %581 = vmatprep.mubr.bf16.mxu0 %v163
  %582 = vmatmul.mubr.bf16.gmra.mrb[0].mxu0 %v162
  %v583 = vpop.f32.mrb[0].mxu0
  %v584 = vadd.f32 %v487, %v583
  %v585 = vpop.f32.mrb[0].mxu0
  %v586 = vpop.f32.mrb[0].mxu0
  %v587 = vadd.f32 %v490, %v586
  %v588 = vpop.f32.mrb[0].mxu0
  %589 = vmatprep.mubr.bf16.mxu0 %v167
  %590 = vmatmul.mubr.bf16.gmra.mrb[0].mxu0 %v166
  %v591 = vpop.f32.mrb[0].mxu0
  %v592 = vadd.f32 %v495, %v591
  %v593 = vpop.f32.mrb[0].mxu0
  %v594 = vpop.f32.mrb[0].mxu0
  %v595 = vadd.f32 %v498, %v594
  %v596 = vpop.f32.mrb[0].mxu0
  %597 = vmatprep.mubr.bf16.mxu0 %v171
  %598 = vmatmul.mubr.bf16.gmra.mrb[0].mxu0 %v170
  %v599 = vpop.f32.mrb[0].mxu0
  %v600 = vadd.f32 %v503, %v599
  %v601 = vpop.f32.mrb[0].mxu0
  %v602 = vpop.f32.mrb[0].mxu0
  %v603 = vadd.f32 %v506, %v602
  %v604 = vpop.f32.mrb[0].mxu0
  %605 = vmatprep.mubr.bf16.mxu0 %v175
  %606 = vmatmul.mubr.bf16.gmra.mrb[0].mxu0 %v174
  %v607 = vpop.f32.mrb[0].mxu0
  %v608 = vadd.f32 %v511, %v607
  %v609 = vpop.f32.mrb[0].mxu0
  %v610 = vpop.f32.mrb[0].mxu0
  %v611 = vadd.f32 %v514, %v610
  %v612 = vpop.f32.mrb[0].mxu0
  %613 = vmatprep.mubr.bf16.mxu0 %v179
  %614 = vmatmul.mubr.bf16.gmra.mrb[0].mxu0 %v178
  %v615 = vpop.f32.mrb[0].mxu0
  %v616 = vadd.f32 %v519, %v615
  %v617 = vpop.f32.mrb[0].mxu0
  %v618 = vpop.f32.mrb[0].mxu0
  %v619 = vadd.f32 %v522, %v618
  %v620 = vpop.f32.mrb[0].mxu0
  %621 = vmatprep.mubr.bf16.mxu0 %v183
  %622 = vmatmul.mubr.bf16.gmra.mrb[0].mxu0 %v182
  %v623 = vpop.f32.mrb[0].mxu0
  %v624 = vadd.f32 %v527, %v623
  %v625 = vpop.f32.mrb[0].mxu0
  %v626 = vpop.f32.mrb[0].mxu0
  %v627 = vadd.f32 %v530, %v626
  %v628 = vpop.f32.mrb[0].mxu0
  %629 = vmatprep.mubr.bf16.mxu0 %v187
  %630 = vmatmul.mubr.bf16.gmra.mrb[0].mxu0 %v186
  %v631 = vpop.f32.mrb[0].mxu0
  %v632 = vadd.f32 %v535, %v631
  %v633 = vpop.f32.mrb[0].mxu0
  %v634 = vpop.f32.mrb[0].mxu0
  %v635 = vadd.f32 %v538, %v634
  %v636 = vpop.f32.mrb[0].mxu0
  %637 = vdwg.mxu0
  %v638 = vmul.f32 %v576, 0.2
  %v639 = vmul.f32 %v579, 0.2
  %v640 = vmul.f32 %v584, 0.2
  %v641 = vmul.f32 %v587, 0.2
  %v642 = vmul.f32 %v592, 0.2
  %v643 = vmul.f32 %v595, 0.2
  %v644 = vmul.f32 %v600, 0.2
  %v645 = vmul.f32 %v603, 0.2
  %v646 = vmul.f32 %v608, 0.2
  %v647 = vmul.f32 %v611, 0.2
  %v648 = vmul.f32 %v616, 0.2
  %v649 = vmul.f32 %v619, 0.2
  %v650 = vmul.f32 %v624, 0.2
  %v651 = vmul.f32 %v627, 0.2
  %v652 = vmul.f32 %v632, 0.2
  %v653 = vmul.f32 %v635, 0.2
  %v654 = vmax.f32 %v576, %v638
  %v655 = vmax.f32 %v579, %v639
  %v656 = vmax.f32 %v584, %v640
  %v657 = vmax.f32 %v587, %v641
  %v658 = vmax.f32 %v592, %v642
  %v659 = vmax.f32 %v595, %v643
  %v660 = vmax.f32 %v600, %v644
  %v661 = vmax.f32 %v603, %v645
  %v662 = vmax.f32 %v608, %v646
  %v663 = vmax.f32 %v611, %v647
  %v664 = vmax.f32 %v616, %v648
  %v665 = vmax.f32 %v619, %v649
  %v666 = vmax.f32 %v624, %v650
  %v667 = vmax.f32 %v627, %v651
  %v668 = vmax.f32 %v632, %v652
  %v669 = vmax.f32 %v635, %v653
  %670 = vst [vmem:[#allocation2] sm:$0xff] 0.0
  %671 = vst [vmem:[#allocation2 + $0x20] sm:$0xff] 0.0
  %672 = vst [vmem:[#allocation2 + $0x40] sm:$0xff] 0.0
  %673 = vst [vmem:[#allocation2 + $0x60] sm:$0xff] 0.0
  %674 = vst [vmem:[#allocation2 + $0x80] sm:$0xff] 0.0
  %675 = vst [vmem:[#allocation2 + $0xa0] sm:$0xff] 0.0
  %676 = vst [vmem:[#allocation2 + $0xc0] sm:$0xff] 0.0
  %677 = vst [vmem:[#allocation2 + $0xe0] sm:$0xff] 0.0
  %678 = vst [vmem:[#allocation2 + $0x18] sm:$0xff] 0.0
  %679 = vst [vmem:[#allocation2 + $0x38] sm:$0xff] 0.0
  %680 = vst [vmem:[#allocation2 + $0x58] sm:$0xff] 0.0
  %681 = vst [vmem:[#allocation2 + $0x78] sm:$0xff] 0.0
  %682 = vst [vmem:[#allocation2 + $0x98] sm:$0xff] 0.0
  %683 = vst [vmem:[#allocation2 + $0xb8] sm:$0xff] 0.0
  %684 = vst [vmem:[#allocation2 + $0xd8] sm:$0xff] 0.0
  %685 = vst [vmem:[#allocation2 + $0xf8] sm:$0xff] 0.0
  %686 = vst [vmem:[#allocation2 + $0x8] sm:$0xff] %v654
  %687 = vst [vmem:[#allocation2 + $0x10] sm:$0xff] %v655
  %688 = vst [vmem:[#allocation2 + $0x28] sm:$0xff] %v656
  %689 = vst [vmem:[#allocation2 + $0x30] sm:$0xff] %v657
  %690 = vst [vmem:[#allocation2 + $0x48] sm:$0xff] %v658
  %691 = vst [vmem:[#allocation2 + $0x50] sm:$0xff] %v659
  %692 = vst [vmem:[#allocation2 + $0x68] sm:$0xff] %v660
  %693 = vst [vmem:[#allocation2 + $0x70] sm:$0xff] %v661
  %694 = vst [vmem:[#allocation2 + $0x88] sm:$0xff] %v662
  %695 = vst [vmem:[#allocation2 + $0x90] sm:$0xff] %v663
  %696 = vst [vmem:[#allocation2 + $0xa8] sm:$0xff] %v664
  %697 = vst [vmem:[#allocation2 + $0xb0] sm:$0xff] %v665
  %698 = vst [vmem:[#allocation2 + $0xc8] sm:$0xff] %v666
  %699 = vst [vmem:[#allocation2 + $0xd0] sm:$0xff] %v667
  %700 = vst [vmem:[#allocation2 + $0xe8] sm:$0xff] %v668
  %701 = vst [vmem:[#allocation2 + $0xf0] sm:$0xff] %v669
  %s702 = scalar_lea.vmem [#allocation2], 7
  %v703 = vld [vmem:[%s702] ss:$2 sm:$0xff]
  %s704 = scalar_lea.vmem [#allocation2], 39
  %v705 = vld [vmem:[%s704] ss:$2 sm:$0xff]
  %s706 = scalar_lea.vmem [#allocation2], 71
  %v707 = vld [vmem:[%s706] ss:$2 sm:$0xff]
  %s708 = scalar_lea.vmem [#allocation2], 103
  %v709 = vld [vmem:[%s708] ss:$2 sm:$0xff]
  %s710 = scalar_lea.vmem [#allocation2], 135
  %v711 = vld [vmem:[%s710] ss:$2 sm:$0xff]
  %s712 = scalar_lea.vmem [#allocation2], 167
  %v713 = vld [vmem:[%s712] ss:$2 sm:$0xff]
  %s714 = scalar_lea.vmem [#allocation2], 199
  %v715 = vld [vmem:[%s714] ss:$2 sm:$0xff]
  %s716 = scalar_lea.vmem [#allocation2], 231
  %v717 = vld [vmem:[%s716] ss:$2 sm:$0xff]
  %s718 = scalar_lea.vmem [#allocation2], 8
  %v719 = vld [vmem:[%s718] ss:$2 sm:$0xff]
  %s720 = scalar_lea.vmem [#allocation2], 40
  %v721 = vld [vmem:[%s720] ss:$2 sm:$0xff]
  %s722 = scalar_lea.vmem [#allocation2], 72
  %v723 = vld [vmem:[%s722] ss:$2 sm:$0xff]
  %s724 = scalar_lea.vmem [#allocation2], 104
  %v725 = vld [vmem:[%s724] ss:$2 sm:$0xff]
  %s726 = scalar_lea.vmem [#allocation2], 136
  %v727 = vld [vmem:[%s726] ss:$2 sm:$0xff]
  %s728 = scalar_lea.vmem [#allocation2], 168
  %v729 = vld [vmem:[%s728] ss:$2 sm:$0xff]
  %s730 = scalar_lea.vmem [#allocation2], 200
  %v731 = vld [vmem:[%s730] ss:$2 sm:$0xff]
  %s732 = scalar_lea.vmem [#allocation2], 232
  %v733 = vld [vmem:[%s732] ss:$2 sm:$0xff]
  %s734 = scalar_lea.vmem [#allocation2], 9
  %v735 = vld [vmem:[%s734] ss:$2 sm:$0xff]
  %s736 = scalar_lea.vmem [#allocation2], 41
  %v737 = vld [vmem:[%s736] ss:$2 sm:$0xff]
  %s738 = scalar_lea.vmem [#allocation2], 73
  %v739 = vld [vmem:[%s738] ss:$2 sm:$0xff]
  %s740 = scalar_lea.vmem [#allocation2], 105
  %v741 = vld [vmem:[%s740] ss:$2 sm:$0xff]
  %s742 = scalar_lea.vmem [#allocation2], 137
  %v743 = vld [vmem:[%s742] ss:$2 sm:$0xff]
  %s744 = scalar_lea.vmem [#allocation2], 169
  %v745 = vld [vmem:[%s744] ss:$2 sm:$0xff]
  %s746 = scalar_lea.vmem [#allocation2], 201
  %v747 = vld [vmem:[%s746] ss:$2 sm:$0xff]
  %s748 = scalar_lea.vmem [#allocation2], 233
  %v749 = vld [vmem:[%s748] ss:$2 sm:$0xff]
  %s750 = scalar_lea.vmem [#allocation2], 10
  %v751 = vld [vmem:[%s750] ss:$2 sm:$0xff]
  %s752 = scalar_lea.vmem [#allocation2], 42
  %v753 = vld [vmem:[%s752] ss:$2 sm:$0xff]
  %s754 = scalar_lea.vmem [#allocation2], 74
  %v755 = vld [vmem:[%s754] ss:$2 sm:$0xff]
  %s756 = scalar_lea.vmem [#allocation2], 106
  %v757 = vld [vmem:[%s756] ss:$2 sm:$0xff]
  %s758 = scalar_lea.vmem [#allocation2], 138
  %v759 = vld [vmem:[%s758] ss:$2 sm:$0xff]
  %s760 = scalar_lea.vmem [#allocation2], 170
  %v761 = vld [vmem:[%s760] ss:$2 sm:$0xff]
  %s762 = scalar_lea.vmem [#allocation2], 202
  %v763 = vld [vmem:[%s762] ss:$2 sm:$0xff]
  %s764 = scalar_lea.vmem [#allocation2], 234
  %v765 = vld [vmem:[%s764] ss:$2 sm:$0xff]
  %v766 = vpack.c.bf16 %v703, %v703
  %v767 = vpack.c.bf16 %v719, %v719
  %v768 = vpack.c.bf16 %v735, %v735
  %v769 = vpack.c.bf16 %v751, %v751
  %v770 = vpack.c.bf16 %v705, %v705
  %v771 = vpack.c.bf16 %v721, %v721
  %v772 = vpack.c.bf16 %v737, %v737
  %v773 = vpack.c.bf16 %v753, %v753
  %v774 = vpack.c.bf16 %v707, %v707
  %v775 = vpack.c.bf16 %v723, %v723
  %v776 = vpack.c.bf16 %v739, %v739
  %v777 = vpack.c.bf16 %v755, %v755
  %v778 = vpack.c.bf16 %v709, %v709
  %v779 = vpack.c.bf16 %v725, %v725
  %v780 = vpack.c.bf16 %v741, %v741
  %v781 = vpack.c.bf16 %v757, %v757
  %v782 = vpack.c.bf16 %v711, %v711
  %v783 = vpack.c.bf16 %v727, %v727
  %v784 = vpack.c.bf16 %v743, %v743
  %v785 = vpack.c.bf16 %v759, %v759
  %v786 = vpack.c.bf16 %v713, %v713
  %v787 = vpack.c.bf16 %v729, %v729
  %v788 = vpack.c.bf16 %v745, %v745
  %v789 = vpack.c.bf16 %v761, %v761
  %v790 = vpack.c.bf16 %v715, %v715
  %v791 = vpack.c.bf16 %v731, %v731
  %v792 = vpack.c.bf16 %v747, %v747
  %v793 = vpack.c.bf16 %v763, %v763
  %v794 = vpack.c.bf16 %v717, %v717
  %v795 = vpack.c.bf16 %v733, %v733
  %v796 = vpack.c.bf16 %v749, %v749
  %v797 = vpack.c.bf16 %v765, %v765
  %v830 = vunpack.c.l.b16 %v766
  %v831 = vunpack.c.l.b16 %v767
  %v832 = vunpack.c.l.b16 %v768
  %v833 = vunpack.c.l.b16 %v769
  %v834 = vunpack.c.l.b16 %v770
  %v835 = vunpack.c.l.b16 %v771
  %v836 = vunpack.c.l.b16 %v772
  %v837 = vunpack.c.l.b16 %v773
  %v838 = vunpack.c.l.b16 %v774
  %v839 = vunpack.c.l.b16 %v775
  %v840 = vunpack.c.l.b16 %v776
  %v841 = vunpack.c.l.b16 %v777
  %v842 = vunpack.c.l.b16 %v778
  %v843 = vunpack.c.l.b16 %v779
  %v844 = vunpack.c.l.b16 %v780
  %v845 = vunpack.c.l.b16 %v781
  %v846 = vunpack.c.l.b16 %v782
  %v847 = vunpack.c.l.b16 %v783
  %v848 = vunpack.c.l.b16 %v784
  %v849 = vunpack.c.l.b16 %v785
  %v850 = vunpack.c.l.b16 %v786
  %v851 = vunpack.c.l.b16 %v787
  %v852 = vunpack.c.l.b16 %v788
  %v853 = vunpack.c.l.b16 %v789
  %v854 = vunpack.c.l.b16 %v790
  %v855 = vunpack.c.l.b16 %v791
  %v856 = vunpack.c.l.b16 %v792
  %v857 = vunpack.c.l.b16 %v793
  %v858 = vunpack.c.l.b16 %v794
  %v859 = vunpack.c.l.b16 %v795
  %v860 = vunpack.c.l.b16 %v796
  %v861 = vunpack.c.l.b16 %v797
  %v862 = vld [vmem:[%s2] sm:$0xf]
  %v863 = vld [vmem:[%s2 + $0x4] sm:$0xf]
  %v864 = vld [vmem:[%s2 + $0x8] sm:$0xf]
  %v865 = vld [vmem:[%s2 + $0xc] sm:$0xf]
  %v866 = vld [vmem:[%s2 + $0x10] sm:$0xf]
  %v867 = vld [vmem:[%s2 + $0x14] sm:$0xf]
  %v868 = vld [vmem:[%s2 + $0x18] sm:$0xf]
  %v869 = vld [vmem:[%s2 + $0x1c] sm:$0xf]
  %v870 = vld [vmem:[%s2 + $0x20] sm:$0xf]
  %v871 = vld [vmem:[%s2 + $0x24] sm:$0xf]
  %v872 = vld [vmem:[%s2 + $0x28] sm:$0xf]
  %v873 = vld [vmem:[%s2 + $0x2c] sm:$0xf]
  %v874 = vld [vmem:[%s2 + $0x30] sm:$0xf]
  %v875 = vld [vmem:[%s2 + $0x34] sm:$0xf]
  %v876 = vld [vmem:[%s2 + $0x38] sm:$0xf]
  %v877 = vld [vmem:[%s2 + $0x3c] sm:$0xf]
  %v878 = vld [vmem:[%s2 + $0x40] sm:$0xf]
  %v879 = vld [vmem:[%s2 + $0x44] sm:$0xf]
  %v880 = vld [vmem:[%s2 + $0x48] sm:$0xf]
  %v881 = vld [vmem:[%s2 + $0x4c] sm:$0xf]
  %v882 = vld [vmem:[%s2 + $0x50] sm:$0xf]
  %v883 = vld [vmem:[%s2 + $0x54] sm:$0xf]
  %v884 = vld [vmem:[%s2 + $0x58] sm:$0xf]
  %v885 = vld [vmem:[%s2 + $0x5c] sm:$0xf]
  %v886 = vld [vmem:[%s2 + $0x60] sm:$0xf]
  %v887 = vld [vmem:[%s2 + $0x64] sm:$0xf]
  %v888 = vld [vmem:[%s2 + $0x68] sm:$0xf]
  %v889 = vld [vmem:[%s2 + $0x6c] sm:$0xf]
  %v890 = vld [vmem:[%s2 + $0x70] sm:$0xf]
  %v891 = vld [vmem:[%s2 + $0x74] sm:$0xf]
  %v892 = vld [vmem:[%s2 + $0x78] sm:$0xf]
  %v893 = vld [vmem:[%s2 + $0x7c] sm:$0xf]
  %v894 = vld [vmem:[%s2 + $0x80] sm:$0xf]
  %v895 = vld [vmem:[%s2 + $0x84] sm:$0xf]
  %v896 = vld [vmem:[%s2 + $0x88] sm:$0xf]
  %v897 = vld [vmem:[%s2 + $0x8c] sm:$0xf]
  %v898 = vld [vmem:[%s2 + $0x90] sm:$0xf]
  %v899 = vld [vmem:[%s2 + $0x94] sm:$0xf]
  %v900 = vld [vmem:[%s2 + $0x98] sm:$0xf]
  %v901 = vld [vmem:[%s2 + $0x9c] sm:$0xf]
  %v902 = vld [vmem:[%s2 + $0xa0] sm:$0xf]
  %v903 = vld [vmem:[%s2 + $0xa4] sm:$0xf]
  %v904 = vld [vmem:[%s2 + $0xa8] sm:$0xf]
  %v905 = vld [vmem:[%s2 + $0xac] sm:$0xf]
  %v906 = vld [vmem:[%s2 + $0xb0] sm:$0xf]
  %v907 = vld [vmem:[%s2 + $0xb4] sm:$0xf]
  %v908 = vld [vmem:[%s2 + $0xb8] sm:$0xf]
  %v909 = vld [vmem:[%s2 + $0xbc] sm:$0xf]
  %v910 = vld [vmem:[%s2 + $0xc0] sm:$0xf]
  %v911 = vld [vmem:[%s2 + $0xc4] sm:$0xf]
  %v912 = vld [vmem:[%s2 + $0xc8] sm:$0xf]
  %v913 = vld [vmem:[%s2 + $0xcc] sm:$0xf]
  %v914 = vld [vmem:[%s2 + $0xd0] sm:$0xf]
  %v915 = vld [vmem:[%s2 + $0xd4] sm:$0xf]
  %v916 = vld [vmem:[%s2 + $0xd8] sm:$0xf]
  %v917 = vld [vmem:[%s2 + $0xdc] sm:$0xf]
  %v918 = vld [vmem:[%s2 + $0xe0] sm:$0xf]
  %v919 = vld [vmem:[%s2 + $0xe4] sm:$0xf]
  %v920 = vld [vmem:[%s2 + $0xe8] sm:$0xf]
  %v921 = vld [vmem:[%s2 + $0xec] sm:$0xf]
  %v922 = vld [vmem:[%s2 + $0xf0] sm:$0xf]
  %v923 = vld [vmem:[%s2 + $0xf4] sm:$0xf]
  %v924 = vld [vmem:[%s2 + $0xf8] sm:$0xf]
  %v925 = vld [vmem:[%s2 + $0xfc] sm:$0xf]
  %v926 = vld [vmem:[%s3] sm:$0x1]
  %v928 = vlaneseq
  %v929 = vshrl.u32 %v928, 7
  %v930 = vsub.s32 0, %v929
  %v931 = vrot.slane %v926, %v930
  %v933 = vpack.c.b16 %v834, %v830
  %v934 = vpack.c.b16 %v835, %v831
  %v935 = vpack.c.b16 %v836, %v832
  %v936 = vpack.c.b16 %v837, %v833
  %v937 = vpack.c.b16 %v842, %v838
  %v938 = vpack.c.b16 %v843, %v839
  %v939 = vpack.c.b16 %v844, %v840
  %v940 = vpack.c.b16 %v845, %v841
  %v941 = vpack.c.b16 %v850, %v846
  %v942 = vpack.c.b16 %v851, %v847
  %v943 = vpack.c.b16 %v852, %v848
  %v944 = vpack.c.b16 %v853, %v849
  %v945 = vpack.c.b16 %v858, %v854
  %v946 = vpack.c.b16 %v859, %v855
  %v947 = vpack.c.b16 %v860, %v856
  %v948 = vpack.c.b16 %v861, %v857
  %v1029 = vunpack.c.l.b16 %v862
  %v1030 = vunpack.c.l.b16 %v863
  %v1031 = vunpack.c.l.b16 %v864
  %v1032 = vunpack.c.l.b16 %v865
  %v1033 = vunpack.c.l.b16 %v866
  %v1034 = vunpack.c.l.b16 %v867
  %v1035 = vunpack.c.l.b16 %v868
  %v1036 = vunpack.c.l.b16 %v869
  %v1037 = vunpack.c.l.b16 %v870
  %v1038 = vunpack.c.l.b16 %v871
  %v1039 = vunpack.c.l.b16 %v872
  %v1040 = vunpack.c.l.b16 %v873
  %v1041 = vunpack.c.l.b16 %v874
  %v1042 = vunpack.c.l.b16 %v875
  %v1043 = vunpack.c.l.b16 %v876
  %v1044 = vunpack.c.l.b16 %v877
  %v1045 = vunpack.c.l.b16 %v878
  %v1046 = vunpack.c.l.b16 %v879
  %v1047 = vunpack.c.l.b16 %v880
  %v1048 = vunpack.c.l.b16 %v881
  %v1049 = vunpack.c.l.b16 %v882
  %v1050 = vunpack.c.l.b16 %v883
  %v1051 = vunpack.c.l.b16 %v884
  %v1052 = vunpack.c.l.b16 %v885
  %v1053 = vunpack.c.l.b16 %v886
  %v1054 = vunpack.c.l.b16 %v887
  %v1055 = vunpack.c.l.b16 %v888
  %v1056 = vunpack.c.l.b16 %v889
  %v1057 = vunpack.c.l.b16 %v890
  %v1058 = vunpack.c.l.b16 %v891
  %v1059 = vunpack.c.l.b16 %v892
  %v1060 = vunpack.c.l.b16 %v893
  %v1061 = vunpack.c.l.b16 %v894
  %v1062 = vunpack.c.l.b16 %v895
  %v1063 = vunpack.c.l.b16 %v896
  %v1064 = vunpack.c.l.b16 %v897
  %v1065 = vunpack.c.l.b16 %v898
  %v1066 = vunpack.c.l.b16 %v899
  %v1067 = vunpack.c.l.b16 %v900
  %v1068 = vunpack.c.l.b16 %v901
  %v1069 = vunpack.c.l.b16 %v902
  %v1070 = vunpack.c.l.b16 %v903
  %v1071 = vunpack.c.l.b16 %v904
  %v1072 = vunpack.c.l.b16 %v905
  %v1073 = vunpack.c.l.b16 %v906
  %v1074 = vunpack.c.l.b16 %v907
  %v1075 = vunpack.c.l.b16 %v908
  %v1076 = vunpack.c.l.b16 %v909
  %v1077 = vunpack.c.l.b16 %v910
  %v1078 = vunpack.c.l.b16 %v911
  %v1079 = vunpack.c.l.b16 %v912
  %v1080 = vunpack.c.l.b16 %v913
  %v1081 = vunpack.c.l.b16 %v914
  %v1082 = vunpack.c.l.b16 %v915
  %v1083 = vunpack.c.l.b16 %v916
  %v1084 = vunpack.c.l.b16 %v917
  %v1085 = vunpack.c.l.b16 %v918
  %v1086 = vunpack.c.l.b16 %v919
  %v1087 = vunpack.c.l.b16 %v920
  %v1088 = vunpack.c.l.b16 %v921
  %v1089 = vunpack.c.l.b16 %v922
  %v1090 = vunpack.c.l.b16 %v923
  %v1091 = vunpack.c.l.b16 %v924
  %v1092 = vunpack.c.l.b16 %v925
  %v1093 = vpack.c.b16 %v1030, %v1029
  %v1094 = vpack.c.b16 %v1032, %v1031
  %v1095 = vpack.c.b16 %v1034, %v1033
  %v1096 = vpack.c.b16 %v1036, %v1035
  %v1097 = vpack.c.b16 %v1038, %v1037
  %v1098 = vpack.c.b16 %v1040, %v1039
  %v1099 = vpack.c.b16 %v1042, %v1041
  %v1100 = vpack.c.b16 %v1044, %v1043
  %v1101 = vpack.c.b16 %v1046, %v1045
  %v1102 = vpack.c.b16 %v1048, %v1047
  %v1103 = vpack.c.b16 %v1050, %v1049
  %v1104 = vpack.c.b16 %v1052, %v1051
  %v1105 = vpack.c.b16 %v1054, %v1053
  %v1106 = vpack.c.b16 %v1056, %v1055
  %v1107 = vpack.c.b16 %v1058, %v1057
  %v1108 = vpack.c.b16 %v1060, %v1059
  %v1109 = vpack.c.b16 %v1062, %v1061
  %v1110 = vpack.c.b16 %v1064, %v1063
  %v1111 = vpack.c.b16 %v1066, %v1065
  %v1112 = vpack.c.b16 %v1068, %v1067
  %v1113 = vpack.c.b16 %v1070, %v1069
  %v1114 = vpack.c.b16 %v1072, %v1071
  %v1115 = vpack.c.b16 %v1074, %v1073
  %v1116 = vpack.c.b16 %v1076, %v1075
  %v1117 = vpack.c.b16 %v1078, %v1077
  %v1118 = vpack.c.b16 %v1080, %v1079
  %v1119 = vpack.c.b16 %v1082, %v1081
  %v1120 = vpack.c.b16 %v1084, %v1083
  %v1121 = vpack.c.b16 %v1086, %v1085
  %v1122 = vpack.c.b16 %v1088, %v1087
  %v1123 = vpack.c.b16 %v1090, %v1089
  %v1124 = vpack.c.b16 %v1092, %v1091
  %1157 = vmatprep.subr.bf16.mxu0 0
  %1158 = vmatpush1.bf16.msra.mxu0 %v1093
  %1159 = vmatprep.subr.bf16.mxu0 0
  %1160 = vmatpush1.bf16.msra.mxu0 %v1094
  %1161 = vmatprep.subr.bf16.mxu0 0
  %1162 = vmatpush1.bf16.msra.mxu0 %v1095
  %1163 = vmatprep.subr.bf16.mxu0 0
  %1164 = vmatpush1.bf16.msra.mxu0 %v1096
  %1165 = vmatprep.subr.bf16.mxu0 0
  %1166 = vmatpush1.bf16.msra.mxu0 %v1097
  %1167 = vmatprep.subr.bf16.mxu0 0
  %1168 = vmatpush1.bf16.msra.mxu0 %v1098
  %1169 = vmatprep.subr.bf16.mxu0 0
  %1170 = vmatpush1.bf16.msra.mxu0 %v1099
  %1171 = vmatprep.subr.bf16.mxu0 0
  %1172 = vmatpush1.bf16.msra.mxu0 %v1100
  %1173 = vmatprep.subr.bf16.mxu0 0
  %1174 = vmatpush1.bf16.msra.mxu0 %v1101
  %1175 = vmatprep.subr.bf16.mxu0 0
  %1176 = vmatpush1.bf16.msra.mxu0 %v1102
  %1177 = vmatprep.subr.bf16.mxu0 0
  %1178 = vmatpush1.bf16.msra.mxu0 %v1103
  %1179 = vmatprep.subr.bf16.mxu0 0
  %1180 = vmatpush1.bf16.msra.mxu0 %v1104
  %1181 = vmatprep.subr.bf16.mxu0 0
  %1182 = vmatpush1.bf16.msra.mxu0 %v1105
  %1183 = vmatprep.subr.bf16.mxu0 0
  %1184 = vmatpush1.bf16.msra.mxu0 %v1106
  %1185 = vmatprep.subr.bf16.mxu0 0
  %1186 = vmatpush1.bf16.msra.mxu0 %v1107
  %1187 = vmatprep.subr.bf16.mxu0 0
  %1188 = vmatpush1.bf16.msra.mxu0 %v1108
  %1189 = vmatprep.mubr.bf16.mxu0 %v934
  %1190 = vmatmul.mubr.bf16.gmra.mrb[0].mxu0 %v933
  %v1191 = vpop.f32.mrb[0].mxu0
  %v1192 = vadd.f32 %v931, %v1191
  %v1193 = vpop.f32.mrb[0].mxu0
  %v1194 = vpop.f32.mrb[0].mxu0
  %v1195 = vadd.f32 %v931, %v1194
  %v1196 = vpop.f32.mrb[0].mxu0
  %1197 = vmatprep.mubr.bf16.mxu0 %v938
  %1198 = vmatmul.mubr.bf16.gmra.mrb[0].mxu0 %v937
  %v1199 = vpop.f32.mrb[0].mxu0
  %v1200 = vadd.f32 %v931, %v1199
  %v1201 = vpop.f32.mrb[0].mxu0
  %v1202 = vpop.f32.mrb[0].mxu0
  %v1203 = vadd.f32 %v931, %v1202
  %v1204 = vpop.f32.mrb[0].mxu0
  %1205 = vmatprep.mubr.bf16.mxu0 %v942
  %1206 = vmatmul.mubr.bf16.gmra.mrb[0].mxu0 %v941
  %v1207 = vpop.f32.mrb[0].mxu0
  %v1208 = vadd.f32 %v931, %v1207
  %v1209 = vpop.f32.mrb[0].mxu0
  %v1210 = vpop.f32.mrb[0].mxu0
  %v1211 = vadd.f32 %v931, %v1210
  %v1212 = vpop.f32.mrb[0].mxu0
  %1213 = vmatprep.mubr.bf16.mxu0 %v946
  %1214 = vmatmul.mubr.bf16.gmra.mrb[0].mxu0 %v945
  %v1215 = vpop.f32.mrb[0].mxu0
  %v1216 = vadd.f32 %v931, %v1215
  %v1217 = vpop.f32.mrb[0].mxu0
  %v1218 = vpop.f32.mrb[0].mxu0
  %v1219 = vadd.f32 %v931, %v1218
  %v1220 = vpop.f32.mrb[0].mxu0
  %1221 = vdwg.mxu0
  %1222 = vmatprep.subr.bf16.mxu0 0
  %1223 = vmatpush1.bf16.msra.mxu0 %v1109
  %1224 = vmatprep.subr.bf16.mxu0 0
  %1225 = vmatpush1.bf16.msra.mxu0 %v1110
  %1226 = vmatprep.subr.bf16.mxu0 0
  %1227 = vmatpush1.bf16.msra.mxu0 %v1111
  %1228 = vmatprep.subr.bf16.mxu0 0
  %1229 = vmatpush1.bf16.msra.mxu0 %v1112
  %1230 = vmatprep.subr.bf16.mxu0 0
  %1231 = vmatpush1.bf16.msra.mxu0 %v1113
  %1232 = vmatprep.subr.bf16.mxu0 0
  %1233 = vmatpush1.bf16.msra.mxu0 %v1114
  %1234 = vmatprep.subr.bf16.mxu0 0
  %1235 = vmatpush1.bf16.msra.mxu0 %v1115
  %1236 = vmatprep.subr.bf16.mxu0 0
  %1237 = vmatpush1.bf16.msra.mxu0 %v1116
  %1238 = vmatprep.subr.bf16.mxu0 0
  %1239 = vmatpush1.bf16.msra.mxu0 %v1117
  %1240 = vmatprep.subr.bf16.mxu0 0
  %1241 = vmatpush1.bf16.msra.mxu0 %v1118
  %1242 = vmatprep.subr.bf16.mxu0 0
  %1243 = vmatpush1.bf16.msra.mxu0 %v1119
  %1244 = vmatprep.subr.bf16.mxu0 0
  %1245 = vmatpush1.bf16.msra.mxu0 %v1120
  %1246 = vmatprep.subr.bf16.mxu0 0
  %1247 = vmatpush1.bf16.msra.mxu0 %v1121
  %1248 = vmatprep.subr.bf16.mxu0 0
  %1249 = vmatpush1.bf16.msra.mxu0 %v1122
  %1250 = vmatprep.subr.bf16.mxu0 0
  %1251 = vmatpush1.bf16.msra.mxu0 %v1123
  %1252 = vmatprep.subr.bf16.mxu0 0
  %1253 = vmatpush1.bf16.msra.mxu0 %v1124
  %1254 = vmatprep.mubr.bf16.mxu0 %v936
  %1255 = vmatmul.mubr.bf16.gmra.mrb[0].mxu0 %v935
  %v1256 = vpop.f32.mrb[0].mxu0
  %v1257 = vadd.f32 %v1192, %v1256
  %v1258 = vpop.f32.mrb[0].mxu0
  %v1259 = vpop.f32.mrb[0].mxu0
  %v1260 = vadd.f32 %v1195, %v1259
  %v1261 = vpop.f32.mrb[0].mxu0
  %1262 = vmatprep.mubr.bf16.mxu0 %v940
  %1263 = vmatmul.mubr.bf16.gmra.mrb[0].mxu0 %v939
  %v1264 = vpop.f32.mrb[0].mxu0
  %v1265 = vadd.f32 %v1200, %v1264
  %v1266 = vpop.f32.mrb[0].mxu0
  %v1267 = vpop.f32.mrb[0].mxu0
  %v1268 = vadd.f32 %v1203, %v1267
  %v1269 = vpop.f32.mrb[0].mxu0
  %1270 = vmatprep.mubr.bf16.mxu0 %v944
  %1271 = vmatmul.mubr.bf16.gmra.mrb[0].mxu0 %v943
  %v1272 = vpop.f32.mrb[0].mxu0
  %v1273 = vadd.f32 %v1208, %v1272
  %v1274 = vpop.f32.mrb[0].mxu0
  %v1275 = vpop.f32.mrb[0].mxu0
  %v1276 = vadd.f32 %v1211, %v1275
  %v1277 = vpop.f32.mrb[0].mxu0
  %1278 = vmatprep.mubr.bf16.mxu0 %v948
  %1279 = vmatmul.mubr.bf16.gmra.mrb[0].mxu0 %v947
  %v1280 = vpop.f32.mrb[0].mxu0
  %v1281 = vadd.f32 %v1216, %v1280
  %v1282 = vpop.f32.mrb[0].mxu0
  %v1283 = vpop.f32.mrb[0].mxu0
  %v1284 = vadd.f32 %v1219, %v1283
  %v1285 = vpop.f32.mrb[0].mxu0
  %1286 = vdwg.mxu0
  %v1287 = vmul.f32 %v1257, 0.2
  %v1288 = vmul.f32 %v1260, 0.2
  %v1289 = vmul.f32 %v1265, 0.2
  %v1290 = vmul.f32 %v1268, 0.2
  %v1291 = vmul.f32 %v1273, 0.2
  %v1292 = vmul.f32 %v1276, 0.2
  %v1293 = vmul.f32 %v1281, 0.2
  %v1294 = vmul.f32 %v1284, 0.2
  %v1295 = vmax.f32 %v1257, %v1287
  %v1296 = vmax.f32 %v1260, %v1288
  %v1297 = vmax.f32 %v1265, %v1289
  %v1298 = vmax.f32 %v1268, %v1290
  %v1299 = vmax.f32 %v1273, %v1291
  %v1300 = vmax.f32 %v1276, %v1292
  %v1301 = vmax.f32 %v1281, %v1293
  %v1302 = vmax.f32 %v1284, %v1294
  %1303 = vst [vmem:[#allocation3] sm:$0xff] 0.0
  %1304 = vst [vmem:[#allocation3 + $0x20] sm:$0xff] 0.0
  %1305 = vst [vmem:[#allocation3 + $0x40] sm:$0xff] 0.0
  %1306 = vst [vmem:[#allocation3 + $0x60] sm:$0xff] 0.0
  %1307 = vst [vmem:[#allocation3 + $0x80] sm:$0xff] 0.0
  %1308 = vst [vmem:[#allocation3 + $0xa0] sm:$0xff] 0.0
  %1309 = vst [vmem:[#allocation3 + $0xc0] sm:$0xff] 0.0
  %1310 = vst [vmem:[#allocation3 + $0xe0] sm:$0xff] 0.0
  %1311 = vst [vmem:[#allocation3 + $0x10] sm:$0xff] 0.0
  %1312 = vst [vmem:[#allocation3 + $0x18] sm:$0xff] 0.0
  %1313 = vst [vmem:[#allocation3 + $0x30] sm:$0xff] 0.0
  %1314 = vst [vmem:[#allocation3 + $0x38] sm:$0xff] 0.0
  %1315 = vst [vmem:[#allocation3 + $0x50] sm:$0xff] 0.0
  %1316 = vst [vmem:[#allocation3 + $0x58] sm:$0xff] 0.0
  %1317 = vst [vmem:[#allocation3 + $0x70] sm:$0xff] 0.0
  %1318 = vst [vmem:[#allocation3 + $0x78] sm:$0xff] 0.0
  %1319 = vst [vmem:[#allocation3 + $0x90] sm:$0xff] 0.0
  %1320 = vst [vmem:[#allocation3 + $0x98] sm:$0xff] 0.0
  %1321 = vst [vmem:[#allocation3 + $0xb0] sm:$0xff] 0.0
  %1322 = vst [vmem:[#allocation3 + $0xb8] sm:$0xff] 0.0
  %1323 = vst [vmem:[#allocation3 + $0xd0] sm:$0xff] 0.0
  %1324 = vst [vmem:[#allocation3 + $0xd8] sm:$0xff] 0.0
  %1325 = vst [vmem:[#allocation3 + $0xf0] sm:$0xff] 0.0
  %1326 = vst [vmem:[#allocation3 + $0xf8] sm:$0xff] 0.0
  %1327 = vst [vmem:[#allocation3 + $0x8] sm:$0xff] %v1295
  %1328 = vst [vmem:[#allocation3 + $0x28] sm:$0xff] %v1296
  %1329 = vst [vmem:[#allocation3 + $0x48] sm:$0xff] %v1297
  %1330 = vst [vmem:[#allocation3 + $0x68] sm:$0xff] %v1298
  %1331 = vst [vmem:[#allocation3 + $0x88] sm:$0xff] %v1299
  %1332 = vst [vmem:[#allocation3 + $0xa8] sm:$0xff] %v1300
  %1333 = vst [vmem:[#allocation3 + $0xc8] sm:$0xff] %v1301
  %1334 = vst [vmem:[#allocation3 + $0xe8] sm:$0xff] %v1302
  %s1335 = scalar_lea.vmem [#allocation3], 7
  %v1336 = vld [vmem:[%s1335] ss:$2 sm:$0xff]
  %s1337 = scalar_lea.vmem [#allocation3], 39
  %v1338 = vld [vmem:[%s1337] ss:$2 sm:$0xff]
  %s1339 = scalar_lea.vmem [#allocation3], 71
  %v1340 = vld [vmem:[%s1339] ss:$2 sm:$0xff]
  %s1341 = scalar_lea.vmem [#allocation3], 103
  %v1342 = vld [vmem:[%s1341] ss:$2 sm:$0xff]
  %s1343 = scalar_lea.vmem [#allocation3], 135
  %v1344 = vld [vmem:[%s1343] ss:$2 sm:$0xff]
  %s1345 = scalar_lea.vmem [#allocation3], 167
  %v1346 = vld [vmem:[%s1345] ss:$2 sm:$0xff]
  %s1347 = scalar_lea.vmem [#allocation3], 199
  %v1348 = vld [vmem:[%s1347] ss:$2 sm:$0xff]
  %s1349 = scalar_lea.vmem [#allocation3], 231
  %v1350 = vld [vmem:[%s1349] ss:$2 sm:$0xff]
  %s1351 = scalar_lea.vmem [#allocation3], 8
  %v1352 = vld [vmem:[%s1351] ss:$2 sm:$0xff]
  %s1353 = scalar_lea.vmem [#allocation3], 40
  %v1354 = vld [vmem:[%s1353] ss:$2 sm:$0xff]
  %s1355 = scalar_lea.vmem [#allocation3], 72
  %v1356 = vld [vmem:[%s1355] ss:$2 sm:$0xff]
  %s1357 = scalar_lea.vmem [#allocation3], 104
  %v1358 = vld [vmem:[%s1357] ss:$2 sm:$0xff]
  %s1359 = scalar_lea.vmem [#allocation3], 136
  %v1360 = vld [vmem:[%s1359] ss:$2 sm:$0xff]
  %s1361 = scalar_lea.vmem [#allocation3], 168
  %v1362 = vld [vmem:[%s1361] ss:$2 sm:$0xff]
  %s1363 = scalar_lea.vmem [#allocation3], 200
  %v1364 = vld [vmem:[%s1363] ss:$2 sm:$0xff]
  %s1365 = scalar_lea.vmem [#allocation3], 232
  %v1366 = vld [vmem:[%s1365] ss:$2 sm:$0xff]
  %s1367 = scalar_lea.vmem [#allocation3], 9
  %v1368 = vld [vmem:[%s1367] ss:$2 sm:$0xff]
  %s1369 = scalar_lea.vmem [#allocation3], 41
  %v1370 = vld [vmem:[%s1369] ss:$2 sm:$0xff]
  %s1371 = scalar_lea.vmem [#allocation3], 73
  %v1372 = vld [vmem:[%s1371] ss:$2 sm:$0xff]
  %s1373 = scalar_lea.vmem [#allocation3], 105
  %v1374 = vld [vmem:[%s1373] ss:$2 sm:$0xff]
  %s1375 = scalar_lea.vmem [#allocation3], 137
  %v1376 = vld [vmem:[%s1375] ss:$2 sm:$0xff]
  %s1377 = scalar_lea.vmem [#allocation3], 169
  %v1378 = vld [vmem:[%s1377] ss:$2 sm:$0xff]
  %s1379 = scalar_lea.vmem [#allocation3], 201
  %v1380 = vld [vmem:[%s1379] ss:$2 sm:$0xff]
  %s1381 = scalar_lea.vmem [#allocation3], 233
  %v1382 = vld [vmem:[%s1381] ss:$2 sm:$0xff]
  %s1383 = scalar_lea.vmem [#allocation3], 10
  %v1384 = vld [vmem:[%s1383] ss:$2 sm:$0xff]
  %s1385 = scalar_lea.vmem [#allocation3], 42
  %v1386 = vld [vmem:[%s1385] ss:$2 sm:$0xff]
  %s1387 = scalar_lea.vmem [#allocation3], 74
  %v1388 = vld [vmem:[%s1387] ss:$2 sm:$0xff]
  %s1389 = scalar_lea.vmem [#allocation3], 106
  %v1390 = vld [vmem:[%s1389] ss:$2 sm:$0xff]
  %s1391 = scalar_lea.vmem [#allocation3], 138
  %v1392 = vld [vmem:[%s1391] ss:$2 sm:$0xff]
  %s1393 = scalar_lea.vmem [#allocation3], 170
  %v1394 = vld [vmem:[%s1393] ss:$2 sm:$0xff]
  %s1395 = scalar_lea.vmem [#allocation3], 202
  %v1396 = vld [vmem:[%s1395] ss:$2 sm:$0xff]
  %s1397 = scalar_lea.vmem [#allocation3], 234
  %v1398 = vld [vmem:[%s1397] ss:$2 sm:$0xff]
  %v1399 = vpack.c.bf16 %v1336, %v1336
  %v1400 = vpack.c.bf16 %v1352, %v1352
  %v1401 = vpack.c.bf16 %v1368, %v1368
  %v1402 = vpack.c.bf16 %v1384, %v1384
  %v1403 = vpack.c.bf16 %v1338, %v1338
  %v1404 = vpack.c.bf16 %v1354, %v1354
  %v1405 = vpack.c.bf16 %v1370, %v1370
  %v1406 = vpack.c.bf16 %v1386, %v1386
  %v1407 = vpack.c.bf16 %v1340, %v1340
  %v1408 = vpack.c.bf16 %v1356, %v1356
  %v1409 = vpack.c.bf16 %v1372, %v1372
  %v1410 = vpack.c.bf16 %v1388, %v1388
  %v1411 = vpack.c.bf16 %v1342, %v1342
  %v1412 = vpack.c.bf16 %v1358, %v1358
  %v1413 = vpack.c.bf16 %v1374, %v1374
  %v1414 = vpack.c.bf16 %v1390, %v1390
  %v1415 = vpack.c.bf16 %v1344, %v1344
  %v1416 = vpack.c.bf16 %v1360, %v1360
  %v1417 = vpack.c.bf16 %v1376, %v1376
  %v1418 = vpack.c.bf16 %v1392, %v1392
  %v1419 = vpack.c.bf16 %v1346, %v1346
  %v1420 = vpack.c.bf16 %v1362, %v1362
  %v1421 = vpack.c.bf16 %v1378, %v1378
  %v1422 = vpack.c.bf16 %v1394, %v1394
  %v1423 = vpack.c.bf16 %v1348, %v1348
  %v1424 = vpack.c.bf16 %v1364, %v1364
  %v1425 = vpack.c.bf16 %v1380, %v1380
  %v1426 = vpack.c.bf16 %v1396, %v1396
  %v1427 = vpack.c.bf16 %v1350, %v1350
  %v1428 = vpack.c.bf16 %v1366, %v1366
  %v1429 = vpack.c.bf16 %v1382, %v1382
  %v1430 = vpack.c.bf16 %v1398, %v1398
  %v1463 = vunpack.c.l.b16 %v1399
  %v1464 = vunpack.c.l.b16 %v1400
  %v1465 = vunpack.c.l.b16 %v1401
  %v1466 = vunpack.c.l.b16 %v1402
  %v1467 = vunpack.c.l.b16 %v1403
  %v1468 = vunpack.c.l.b16 %v1404
  %v1469 = vunpack.c.l.b16 %v1405
  %v1470 = vunpack.c.l.b16 %v1406
  %v1471 = vunpack.c.l.b16 %v1407
  %v1472 = vunpack.c.l.b16 %v1408
  %v1473 = vunpack.c.l.b16 %v1409
  %v1474 = vunpack.c.l.b16 %v1410
  %v1475 = vunpack.c.l.b16 %v1411
  %v1476 = vunpack.c.l.b16 %v1412
  %v1477 = vunpack.c.l.b16 %v1413
  %v1478 = vunpack.c.l.b16 %v1414
  %v1479 = vunpack.c.l.b16 %v1415
  %v1480 = vunpack.c.l.b16 %v1416
  %v1481 = vunpack.c.l.b16 %v1417
  %v1482 = vunpack.c.l.b16 %v1418
  %v1483 = vunpack.c.l.b16 %v1419
  %v1484 = vunpack.c.l.b16 %v1420
  %v1485 = vunpack.c.l.b16 %v1421
  %v1486 = vunpack.c.l.b16 %v1422
  %v1487 = vunpack.c.l.b16 %v1423
  %v1488 = vunpack.c.l.b16 %v1424
  %v1489 = vunpack.c.l.b16 %v1425
  %v1490 = vunpack.c.l.b16 %v1426
  %v1491 = vunpack.c.l.b16 %v1427
  %v1492 = vunpack.c.l.b16 %v1428
  %v1493 = vunpack.c.l.b16 %v1429
  %v1494 = vunpack.c.l.b16 %v1430
  %v1495 = vld [vmem:[%s4] sm:$0xf]
  %v1496 = vld [vmem:[%s4 + $0x4] sm:$0xf]
  %v1497 = vld [vmem:[%s4 + $0x8] sm:$0xf]
  %v1498 = vld [vmem:[%s4 + $0xc] sm:$0xf]
  %v1499 = vld [vmem:[%s4 + $0x10] sm:$0xf]
  %v1500 = vld [vmem:[%s4 + $0x14] sm:$0xf]
  %v1501 = vld [vmem:[%s4 + $0x18] sm:$0xf]
  %v1502 = vld [vmem:[%s4 + $0x1c] sm:$0xf]
  %v1503 = vld [vmem:[%s4 + $0x20] sm:$0xf]
  %v1504 = vld [vmem:[%s4 + $0x24] sm:$0xf]
  %v1505 = vld [vmem:[%s4 + $0x28] sm:$0xf]
  %v1506 = vld [vmem:[%s4 + $0x2c] sm:$0xf]
  %v1507 = vld [vmem:[%s4 + $0x30] sm:$0xf]
  %v1508 = vld [vmem:[%s4 + $0x34] sm:$0xf]
  %v1509 = vld [vmem:[%s4 + $0x38] sm:$0xf]
  %v1510 = vld [vmem:[%s4 + $0x3c] sm:$0xf]
  %v1511 = vld [vmem:[%s4 + $0x40] sm:$0xf]
  %v1512 = vld [vmem:[%s4 + $0x44] sm:$0xf]
  %v1513 = vld [vmem:[%s4 + $0x48] sm:$0xf]
  %v1514 = vld [vmem:[%s4 + $0x4c] sm:$0xf]
  %v1515 = vld [vmem:[%s4 + $0x50] sm:$0xf]
  %v1516 = vld [vmem:[%s4 + $0x54] sm:$0xf]
  %v1517 = vld [vmem:[%s4 + $0x58] sm:$0xf]
  %v1518 = vld [vmem:[%s4 + $0x5c] sm:$0xf]
  %v1519 = vld [vmem:[%s4 + $0x60] sm:$0xf]
  %v1520 = vld [vmem:[%s4 + $0x64] sm:$0xf]
  %v1521 = vld [vmem:[%s4 + $0x68] sm:$0xf]
  %v1522 = vld [vmem:[%s4 + $0x6c] sm:$0xf]
  %v1523 = vld [vmem:[%s4 + $0x70] sm:$0xf]
  %v1524 = vld [vmem:[%s4 + $0x74] sm:$0xf]
  %v1525 = vld [vmem:[%s4 + $0x78] sm:$0xf]
  %v1526 = vld [vmem:[%s4 + $0x7c] sm:$0xf]
  %v1527 = vld [vmem:[%s4 + $0x80] sm:$0xf]
  %v1528 = vld [vmem:[%s4 + $0x84] sm:$0xf]
  %v1529 = vld [vmem:[%s4 + $0x88] sm:$0xf]
  %v1530 = vld [vmem:[%s4 + $0x8c] sm:$0xf]
  %v1531 = vld [vmem:[%s4 + $0x90] sm:$0xf]
  %v1532 = vld [vmem:[%s4 + $0x94] sm:$0xf]
  %v1533 = vld [vmem:[%s4 + $0x98] sm:$0xf]
  %v1534 = vld [vmem:[%s4 + $0x9c] sm:$0xf]
  %v1535 = vld [vmem:[%s4 + $0xa0] sm:$0xf]
  %v1536 = vld [vmem:[%s4 + $0xa4] sm:$0xf]
  %v1537 = vld [vmem:[%s4 + $0xa8] sm:$0xf]
  %v1538 = vld [vmem:[%s4 + $0xac] sm:$0xf]
  %v1539 = vld [vmem:[%s4 + $0xb0] sm:$0xf]
  %v1540 = vld [vmem:[%s4 + $0xb4] sm:$0xf]
  %v1541 = vld [vmem:[%s4 + $0xb8] sm:$0xf]
  %v1542 = vld [vmem:[%s4 + $0xbc] sm:$0xf]
  %v1543 = vld [vmem:[%s4 + $0xc0] sm:$0xf]
  %v1544 = vld [vmem:[%s4 + $0xc4] sm:$0xf]
  %v1545 = vld [vmem:[%s4 + $0xc8] sm:$0xf]
  %v1546 = vld [vmem:[%s4 + $0xcc] sm:$0xf]
  %v1547 = vld [vmem:[%s4 + $0xd0] sm:$0xf]
  %v1548 = vld [vmem:[%s4 + $0xd4] sm:$0xf]
  %v1549 = vld [vmem:[%s4 + $0xd8] sm:$0xf]
  %v1550 = vld [vmem:[%s4 + $0xdc] sm:$0xf]
  %v1551 = vld [vmem:[%s4 + $0xe0] sm:$0xf]
  %v1552 = vld [vmem:[%s4 + $0xe4] sm:$0xf]
  %v1553 = vld [vmem:[%s4 + $0xe8] sm:$0xf]
  %v1554 = vld [vmem:[%s4 + $0xec] sm:$0xf]
  %v1555 = vld [vmem:[%s4 + $0xf0] sm:$0xf]
  %v1556 = vld [vmem:[%s4 + $0xf4] sm:$0xf]
  %v1557 = vld [vmem:[%s4 + $0xf8] sm:$0xf]
  %v1558 = vld [vmem:[%s4 + $0xfc] sm:$0xf]
  %v1559 = vld [vmem:[%s5] sm:$0x1]
  %v1561 = vlaneseq
  %v1562 = vshrl.u32 %v1561, 7
  %v1563 = vsub.s32 0, %v1562
  %v1564 = vrot.slane %v1559, %v1563
  %v1566 = vpack.c.b16 %v1467, %v1463
  %v1567 = vpack.c.b16 %v1468, %v1464
  %v1568 = vpack.c.b16 %v1469, %v1465
  %v1569 = vpack.c.b16 %v1470, %v1466
  %v1570 = vpack.c.b16 %v1475, %v1471
  %v1571 = vpack.c.b16 %v1476, %v1472
  %v1572 = vpack.c.b16 %v1477, %v1473
  %v1573 = vpack.c.b16 %v1478, %v1474
  %v1574 = vpack.c.b16 %v1483, %v1479
  %v1575 = vpack.c.b16 %v1484, %v1480
  %v1576 = vpack.c.b16 %v1485, %v1481
  %v1577 = vpack.c.b16 %v1486, %v1482
  %v1578 = vpack.c.b16 %v1491, %v1487
  %v1579 = vpack.c.b16 %v1492, %v1488
  %v1580 = vpack.c.b16 %v1493, %v1489
  %v1581 = vpack.c.b16 %v1494, %v1490
  %v1662 = vunpack.c.l.b16 %v1495
  %v1663 = vunpack.c.l.b16 %v1496
  %v1664 = vunpack.c.l.b16 %v1497
  %v1665 = vunpack.c.l.b16 %v1498
  %v1666 = vunpack.c.l.b16 %v1499
  %v1667 = vunpack.c.l.b16 %v1500
  %v1668 = vunpack.c.l.b16 %v1501
  %v1669 = vunpack.c.l.b16 %v1502
  %v1670 = vunpack.c.l.b16 %v1503
  %v1671 = vunpack.c.l.b16 %v1504
  %v1672 = vunpack.c.l.b16 %v1505
  %v1673 = vunpack.c.l.b16 %v1506
  %v1674 = vunpack.c.l.b16 %v1507
  %v1675 = vunpack.c.l.b16 %v1508
  %v1676 = vunpack.c.l.b16 %v1509
  %v1677 = vunpack.c.l.b16 %v1510
  %v1678 = vunpack.c.l.b16 %v1511
  %v1679 = vunpack.c.l.b16 %v1512
  %v1680 = vunpack.c.l.b16 %v1513
  %v1681 = vunpack.c.l.b16 %v1514
  %v1682 = vunpack.c.l.b16 %v1515
  %v1683 = vunpack.c.l.b16 %v1516
  %v1684 = vunpack.c.l.b16 %v1517
  %v1685 = vunpack.c.l.b16 %v1518
  %v1686 = vunpack.c.l.b16 %v1519
  %v1687 = vunpack.c.l.b16 %v1520
  %v1688 = vunpack.c.l.b16 %v1521
  %v1689 = vunpack.c.l.b16 %v1522
  %v1690 = vunpack.c.l.b16 %v1523
  %v1691 = vunpack.c.l.b16 %v1524
  %v1692 = vunpack.c.l.b16 %v1525
  %v1693 = vunpack.c.l.b16 %v1526
  %v1694 = vunpack.c.l.b16 %v1527
  %v1695 = vunpack.c.l.b16 %v1528
  %v1696 = vunpack.c.l.b16 %v1529
  %v1697 = vunpack.c.l.b16 %v1530
  %v1698 = vunpack.c.l.b16 %v1531
  %v1699 = vunpack.c.l.b16 %v1532
  %v1700 = vunpack.c.l.b16 %v1533
  %v1701 = vunpack.c.l.b16 %v1534
  %v1702 = vunpack.c.l.b16 %v1535
  %v1703 = vunpack.c.l.b16 %v1536
  %v1704 = vunpack.c.l.b16 %v1537
  %v1705 = vunpack.c.l.b16 %v1538
  %v1706 = vunpack.c.l.b16 %v1539
  %v1707 = vunpack.c.l.b16 %v1540
  %v1708 = vunpack.c.l.b16 %v1541
  %v1709 = vunpack.c.l.b16 %v1542
  %v1710 = vunpack.c.l.b16 %v1543
  %v1711 = vunpack.c.l.b16 %v1544
  %v1712 = vunpack.c.l.b16 %v1545
  %v1713 = vunpack.c.l.b16 %v1546
  %v1714 = vunpack.c.l.b16 %v1547
  %v1715 = vunpack.c.l.b16 %v1548
  %v1716 = vunpack.c.l.b16 %v1549
  %v1717 = vunpack.c.l.b16 %v1550
  %v1718 = vunpack.c.l.b16 %v1551
  %v1719 = vunpack.c.l.b16 %v1552
  %v1720 = vunpack.c.l.b16 %v1553
  %v1721 = vunpack.c.l.b16 %v1554
  %v1722 = vunpack.c.l.b16 %v1555
  %v1723 = vunpack.c.l.b16 %v1556
  %v1724 = vunpack.c.l.b16 %v1557
  %v1725 = vunpack.c.l.b16 %v1558
  %v1726 = vpack.c.b16 %v1663, %v1662
  %v1727 = vpack.c.b16 %v1665, %v1664
  %v1728 = vpack.c.b16 %v1667, %v1666
  %v1729 = vpack.c.b16 %v1669, %v1668
  %v1730 = vpack.c.b16 %v1671, %v1670
  %v1731 = vpack.c.b16 %v1673, %v1672
  %v1732 = vpack.c.b16 %v1675, %v1674
  %v1733 = vpack.c.b16 %v1677, %v1676
  %v1734 = vpack.c.b16 %v1679, %v1678
  %v1735 = vpack.c.b16 %v1681, %v1680
  %v1736 = vpack.c.b16 %v1683, %v1682
  %v1737 = vpack.c.b16 %v1685, %v1684
  %v1738 = vpack.c.b16 %v1687, %v1686
  %v1739 = vpack.c.b16 %v1689, %v1688
  %v1740 = vpack.c.b16 %v1691, %v1690
  %v1741 = vpack.c.b16 %v1693, %v1692
  %v1742 = vpack.c.b16 %v1695, %v1694
  %v1743 = vpack.c.b16 %v1697, %v1696
  %v1744 = vpack.c.b16 %v1699, %v1698
  %v1745 = vpack.c.b16 %v1701, %v1700
  %v1746 = vpack.c.b16 %v1703, %v1702
  %v1747 = vpack.c.b16 %v1705, %v1704
  %v1748 = vpack.c.b16 %v1707, %v1706
  %v1749 = vpack.c.b16 %v1709, %v1708
  %v1750 = vpack.c.b16 %v1711, %v1710
  %v1751 = vpack.c.b16 %v1713, %v1712
  %v1752 = vpack.c.b16 %v1715, %v1714
  %v1753 = vpack.c.b16 %v1717, %v1716
  %v1754 = vpack.c.b16 %v1719, %v1718
  %v1755 = vpack.c.b16 %v1721, %v1720
  %v1756 = vpack.c.b16 %v1723, %v1722
  %v1757 = vpack.c.b16 %v1725, %v1724
  %1790 = vmatprep.subr.bf16.mxu0 0
  %1791 = vmatpush1.bf16.msra.mxu0 %v1726
  %1792 = vmatprep.subr.bf16.mxu0 0
  %1793 = vmatpush1.bf16.msra.mxu0 %v1727
  %1794 = vmatprep.subr.bf16.mxu0 0
  %1795 = vmatpush1.bf16.msra.mxu0 %v1728
  %1796 = vmatprep.subr.bf16.mxu0 0
  %1797 = vmatpush1.bf16.msra.mxu0 %v1729
  %1798 = vmatprep.subr.bf16.mxu0 0
  %1799 = vmatpush1.bf16.msra.mxu0 %v1730
  %1800 = vmatprep.subr.bf16.mxu0 0
  %1801 = vmatpush1.bf16.msra.mxu0 %v1731
  %1802 = vmatprep.subr.bf16.mxu0 0
  %1803 = vmatpush1.bf16.msra.mxu0 %v1732
  %1804 = vmatprep.subr.bf16.mxu0 0
  %1805 = vmatpush1.bf16.msra.mxu0 %v1733
  %1806 = vmatprep.subr.bf16.mxu0 0
  %1807 = vmatpush1.bf16.msra.mxu0 %v1734
  %1808 = vmatprep.subr.bf16.mxu0 0
  %1809 = vmatpush1.bf16.msra.mxu0 %v1735
  %1810 = vmatprep.subr.bf16.mxu0 0
  %1811 = vmatpush1.bf16.msra.mxu0 %v1736
  %1812 = vmatprep.subr.bf16.mxu0 0
  %1813 = vmatpush1.bf16.msra.mxu0 %v1737
  %1814 = vmatprep.subr.bf16.mxu0 0
  %1815 = vmatpush1.bf16.msra.mxu0 %v1738
  %1816 = vmatprep.subr.bf16.mxu0 0
  %1817 = vmatpush1.bf16.msra.mxu0 %v1739
  %1818 = vmatprep.subr.bf16.mxu0 0
  %1819 = vmatpush1.bf16.msra.mxu0 %v1740
  %1820 = vmatprep.subr.bf16.mxu0 0
  %1821 = vmatpush1.bf16.msra.mxu0 %v1741
  %1822 = vmatprep.mubr.bf16.mxu0 %v1567
  %1823 = vmatmul.mubr.bf16.gmra.mrb[0].mxu0 %v1566
  %v1824 = vpop.f32.mrb[0].mxu0
  %v1825 = vadd.f32 %v1564, %v1824
  %v1826 = vpop.f32.mrb[0].mxu0
  %v1827 = vpop.f32.mrb[0].mxu0
  %v1828 = vadd.f32 %v1564, %v1827
  %v1829 = vpop.f32.mrb[0].mxu0
  %1830 = vmatprep.mubr.bf16.mxu0 %v1571
  %1831 = vmatmul.mubr.bf16.gmra.mrb[0].mxu0 %v1570
  %v1832 = vpop.f32.mrb[0].mxu0
  %v1833 = vadd.f32 %v1564, %v1832
  %v1834 = vpop.f32.mrb[0].mxu0
  %v1835 = vpop.f32.mrb[0].mxu0
  %v1836 = vadd.f32 %v1564, %v1835
  %v1837 = vpop.f32.mrb[0].mxu0
  %1838 = vmatprep.mubr.bf16.mxu0 %v1575
  %1839 = vmatmul.mubr.bf16.gmra.mrb[0].mxu0 %v1574
  %v1840 = vpop.f32.mrb[0].mxu0
  %v1841 = vadd.f32 %v1564, %v1840
  %v1842 = vpop.f32.mrb[0].mxu0
  %v1843 = vpop.f32.mrb[0].mxu0
  %v1844 = vadd.f32 %v1564, %v1843
  %v1845 = vpop.f32.mrb[0].mxu0
  %1846 = vmatprep.mubr.bf16.mxu0 %v1579
  %1847 = vmatmul.mubr.bf16.gmra.mrb[0].mxu0 %v1578
  %v1848 = vpop.f32.mrb[0].mxu0
  %v1849 = vadd.f32 %v1564, %v1848
  %v1850 = vpop.f32.mrb[0].mxu0
  %v1851 = vpop.f32.mrb[0].mxu0
  %v1852 = vadd.f32 %v1564, %v1851
  %v1853 = vpop.f32.mrb[0].mxu0
  %1854 = vdwg.mxu0
  %1855 = vmatprep.subr.bf16.mxu0 0
  %1856 = vmatpush1.bf16.msra.mxu0 %v1742
  %1857 = vmatprep.subr.bf16.mxu0 0
  %1858 = vmatpush1.bf16.msra.mxu0 %v1743
  %1859 = vmatprep.subr.bf16.mxu0 0
  %1860 = vmatpush1.bf16.msra.mxu0 %v1744
  %1861 = vmatprep.subr.bf16.mxu0 0
  %1862 = vmatpush1.bf16.msra.mxu0 %v1745
  %1863 = vmatprep.subr.bf16.mxu0 0
  %1864 = vmatpush1.bf16.msra.mxu0 %v1746
  %1865 = vmatprep.subr.bf16.mxu0 0
  %1866 = vmatpush1.bf16.msra.mxu0 %v1747
  %1867 = vmatprep.subr.bf16.mxu0 0
  %1868 = vmatpush1.bf16.msra.mxu0 %v1748
  %1869 = vmatprep.subr.bf16.mxu0 0
  %1870 = vmatpush1.bf16.msra.mxu0 %v1749
  %1871 = vmatprep.subr.bf16.mxu0 0
  %1872 = vmatpush1.bf16.msra.mxu0 %v1750
  %1873 = vmatprep.subr.bf16.mxu0 0
  %1874 = vmatpush1.bf16.msra.mxu0 %v1751
  %1875 = vmatprep.subr.bf16.mxu0 0
  %1876 = vmatpush1.bf16.msra.mxu0 %v1752
  %1877 = vmatprep.subr.bf16.mxu0 0
  %1878 = vmatpush1.bf16.msra.mxu0 %v1753
  %1879 = vmatprep.subr.bf16.mxu0 0
  %1880 = vmatpush1.bf16.msra.mxu0 %v1754
  %1881 = vmatprep.subr.bf16.mxu0 0
  %1882 = vmatpush1.bf16.msra.mxu0 %v1755
  %1883 = vmatprep.subr.bf16.mxu0 0
  %1884 = vmatpush1.bf16.msra.mxu0 %v1756
  %1885 = vmatprep.subr.bf16.mxu0 0
  %1886 = vmatpush1.bf16.msra.mxu0 %v1757
  %1887 = vmatprep.mubr.bf16.mxu0 %v1569
  %1888 = vmatmul.mubr.bf16.gmra.mrb[0].mxu0 %v1568
  %v1889 = vpop.f32.mrb[0].mxu0
  %v1890 = vadd.f32 %v1825, %v1889
  %v1891 = vpop.f32.mrb[0].mxu0
  %v1892 = vpop.f32.mrb[0].mxu0
  %v1893 = vadd.f32 %v1828, %v1892
  %v1894 = vpop.f32.mrb[0].mxu0
  %1895 = vmatprep.mubr.bf16.mxu0 %v1573
  %1896 = vmatmul.mubr.bf16.gmra.mrb[0].mxu0 %v1572
  %v1897 = vpop.f32.mrb[0].mxu0
  %v1898 = vadd.f32 %v1833, %v1897
  %v1899 = vpop.f32.mrb[0].mxu0
  %v1900 = vpop.f32.mrb[0].mxu0
  %v1901 = vadd.f32 %v1836, %v1900
  %v1902 = vpop.f32.mrb[0].mxu0
  %1903 = vmatprep.mubr.bf16.mxu0 %v1577
  %1904 = vmatmul.mubr.bf16.gmra.mrb[0].mxu0 %v1576
  %v1905 = vpop.f32.mrb[0].mxu0
  %v1906 = vadd.f32 %v1841, %v1905
  %v1907 = vpop.f32.mrb[0].mxu0
  %v1908 = vpop.f32.mrb[0].mxu0
  %v1909 = vadd.f32 %v1844, %v1908
  %v1910 = vpop.f32.mrb[0].mxu0
  %1911 = vmatprep.mubr.bf16.mxu0 %v1581
  %1912 = vmatmul.mubr.bf16.gmra.mrb[0].mxu0 %v1580
  %v1913 = vpop.f32.mrb[0].mxu0
  %v1914 = vadd.f32 %v1849, %v1913
  %v1915 = vpop.f32.mrb[0].mxu0
  %v1916 = vpop.f32.mrb[0].mxu0
  %v1917 = vadd.f32 %v1852, %v1916
  %v1918 = vpop.f32.mrb[0].mxu0
  %1919 = vdwg.mxu0
  %v1920 = vmul.f32 %v1890, 0.2
  %v1921 = vmul.f32 %v1893, 0.2
  %v1922 = vmul.f32 %v1898, 0.2
  %v1923 = vmul.f32 %v1901, 0.2
  %v1924 = vmul.f32 %v1906, 0.2
  %v1925 = vmul.f32 %v1909, 0.2
  %v1926 = vmul.f32 %v1914, 0.2
  %v1927 = vmul.f32 %v1917, 0.2
  %v1928 = vmax.f32 %v1890, %v1920
  %v1929 = vmax.f32 %v1893, %v1921
  %v1930 = vmax.f32 %v1898, %v1922
  %v1931 = vmax.f32 %v1901, %v1923
  %v1932 = vmax.f32 %v1906, %v1924
  %v1933 = vmax.f32 %v1909, %v1925
  %v1934 = vmax.f32 %v1914, %v1926
  %v1935 = vmax.f32 %v1917, %v1927
  %1936 = vst [vmem:[%s7] sm:$0xff] %v1928
  %1937 = vst [vmem:[%s7 + $0x8] sm:$0xff] %v1929
  %1938 = vst [vmem:[%s7 + $0x10] sm:$0xff] %v1930
  %1939 = vst [vmem:[%s7 + $0x18] sm:$0xff] %v1931
  %1940 = vst [vmem:[%s7 + $0x20] sm:$0xff] %v1932
  %1941 = vst [vmem:[%s7 + $0x28] sm:$0xff] %v1933
  %1942 = vst [vmem:[%s7 + $0x30] sm:$0xff] %v1934
  %1943 = vst [vmem:[%s7 + $0x38] sm:$0xff] %v1935
  %v1944 = vld [vmem:[%s6] sm:$0xff]
  %v1945 = vmul.f32 %v1928, %v1944
  %v1946 = vmul.f32 %v1929, %v1944
  %v1947 = vmul.f32 %v1930, %v1944
  %v1948 = vmul.f32 %v1931, %v1944
  %v1949 = vmul.f32 %v1932, %v1944
  %v1950 = vmul.f32 %v1933, %v1944
  %v1951 = vmul.f32 %v1934, %v1944
  %v1952 = vmul.f32 %v1935, %v1944
  %1953 = vadd.xlane.f32.xlu0 %v1945
  %v1954 = vpop.xlane.xlu0 %1953
  %1955 = vadd.xlane.f32.xlu0 %v1946
  %v1956 = vpop.xlane.xlu0 %1955
  %1957 = vadd.xlane.f32.xlu0 %v1947
  %v1958 = vpop.xlane.xlu0 %1957
  %1959 = vadd.xlane.f32.xlu0 %v1948
  %v1960 = vpop.xlane.xlu0 %1959
  %1961 = vadd.xlane.f32.xlu0 %v1949
  %v1962 = vpop.xlane.xlu0 %1961
  %1963 = vadd.xlane.f32.xlu0 %v1950
  %v1964 = vpop.xlane.xlu0 %1963
  %1965 = vadd.xlane.f32.xlu0 %v1951
  %v1966 = vpop.xlane.xlu0 %1965
  %1967 = vadd.xlane.f32.xlu0 %v1952
  %v1968 = vpop.xlane.xlu0 %1967
  %v1969 = vrot.slane %v1954, 4
  %v1970 = vadd.f32 %v1954, %v1969
  %v1971 = vrot.slane %v1970, 2
  %v1972 = vadd.f32 %v1970, %v1971
  %v1973 = vrot.slane %v1972, 1
  %v1974 = vadd.f32 %v1972, %v1973
  %v1975 = vrot.slane %v1956, 4
  %v1976 = vadd.f32 %v1956, %v1975
  %v1977 = vrot.slane %v1976, 2
  %v1978 = vadd.f32 %v1976, %v1977
  %v1979 = vrot.slane %v1978, 1
  %v1980 = vadd.f32 %v1978, %v1979
  %v1981 = vrot.slane %v1958, 4
  %v1982 = vadd.f32 %v1958, %v1981
  %v1983 = vrot.slane %v1982, 2
  %v1984 = vadd.f32 %v1982, %v1983
  %v1985 = vrot.slane %v1984, 1
  %v1986 = vadd.f32 %v1984, %v1985
  %v1987 = vrot.slane %v1960, 4
  %v1988 = vadd.f32 %v1960, %v1987
  %v1989 = vrot.slane %v1988, 2
  %v1990 = vadd.f32 %v1988, %v1989
  %v1991 = vrot.slane %v1990, 1
  %v1992 = vadd.f32 %v1990, %v1991
  %v1993 = vrot.slane %v1962, 4
  %v1994 = vadd.f32 %v1962, %v1993
  %v1995 = vrot.slane %v1994, 2
  %v1996 = vadd.f32 %v1994, %v1995
  %v1997 = vrot.slane %v1996, 1
  %v1998 = vadd.f32 %v1996, %v1997
  %v1999 = vrot.slane %v1964, 4
  %v2000 = vadd.f32 %v1964, %v1999
  %v2001 = vrot.slane %v2000, 2
  %v2002 = vadd.f32 %v2000, %v2001
  %v2003 = vrot.slane %v2002, 1
  %v2004 = vadd.f32 %v2002, %v2003
  %v2005 = vrot.slane %v1966, 4
  %v2006 = vadd.f32 %v1966, %v2005
  %v2007 = vrot.slane %v2006, 2
  %v2008 = vadd.f32 %v2006, %v2007
  %v2009 = vrot.slane %v2008, 1
  %v2010 = vadd.f32 %v2008, %v2009
  %v2011 = vrot.slane %v1968, 4
  %v2012 = vadd.f32 %v1968, %v2011
  %v2013 = vrot.slane %v2012, 2
  %v2014 = vadd.f32 %v2012, %v2013
  %v2015 = vrot.slane %v2014, 1
  %v2016 = vadd.f32 %v2014, %v2015
  %v2017 = vand.u32 2147483647, %v1974
  %v2018 = vand.u32 2147483647, %v1980
  %v2019 = vand.u32 2147483647, %v1986
  %v2020 = vand.u32 2147483647, %v1992
  %v2021 = vand.u32 2147483647, %v1998
  %v2022 = vand.u32 2147483647, %v2004
  %v2023 = vand.u32 2147483647, %v2010
  %v2024 = vand.u32 2147483647, %v2016
  %v2025 = vsub.f32 0.0, %v2017
  %v2026 = vsub.f32 0.0, %v2018
  %v2027 = vsub.f32 0.0, %v2019
  %v2028 = vsub.f32 0.0, %v2020
  %v2029 = vsub.f32 0.0, %v2021
  %v2030 = vsub.f32 0.0, %v2022
  %v2031 = vsub.f32 0.0, %v2023
  %v2032 = vsub.f32 0.0, %v2024
  %v2033 = vmul.f32 %v2025, 1.442695
  %v2034 = vpow.pop %v2033
  %v2035 = vmul.f32 %v2026, 1.442695
  %v2036 = vpow.pop %v2035
  %v2037 = vmul.f32 %v2027, 1.442695
  %v2038 = vpow.pop %v2037
  %v2039 = vmul.f32 %v2028, 1.442695
  %v2040 = vpow.pop %v2039
  %v2041 = vmul.f32 %v2029, 1.442695
  %v2042 = vpow.pop %v2041
  %v2043 = vmul.f32 %v2030, 1.442695
  %v2044 = vpow.pop %v2043
  %v2045 = vmul.f32 %v2031, 1.442695
  %v2046 = vpow.pop %v2045
  %v2047 = vmul.f32 %v2032, 1.442695
  %v2048 = vpow.pop %v2047
  %vm2049 = vcmp.ge.f32.partialorder %v1974, 0.0
  %vm2050 = vcmp.ge.f32.partialorder %v1980, 0.0
  %vm2051 = vcmp.ge.f32.partialorder %v1986, 0.0
  %vm2052 = vcmp.ge.f32.partialorder %v1992, 0.0
  %vm2053 = vcmp.ge.f32.partialorder %v1998, 0.0
  %vm2054 = vcmp.ge.f32.partialorder %v2004, 0.0
  %vm2055 = vcmp.ge.f32.partialorder %v2010, 0.0
  %vm2056 = vcmp.ge.f32.partialorder %v2016, 0.0
  %v2057 = vadd.f32 %v2034, 1.0
  %v2058 = vadd.f32 %v2036, 1.0
  %v2059 = vadd.f32 %v2038, 1.0
  %v2060 = vadd.f32 %v2040, 1.0
  %v2061 = vadd.f32 %v2042, 1.0
  %v2062 = vadd.f32 %v2044, 1.0
  %v2063 = vadd.f32 %v2046, 1.0
  %v2064 = vadd.f32 %v2048, 1.0
  %v2065 = vrcp.pop %v2057
  %v2066 = vmul.f32 1.0, %v2065
  %v2067 = vrcp.pop %v2058
  %v2068 = vmul.f32 1.0, %v2067
  %v2069 = vrcp.pop %v2059
  %v2070 = vmul.f32 1.0, %v2069
  %v2071 = vrcp.pop %v2060
  %v2072 = vmul.f32 1.0, %v2071
  %v2073 = vrcp.pop %v2061
  %v2074 = vmul.f32 1.0, %v2073
  %v2075 = vrcp.pop %v2062
  %v2076 = vmul.f32 1.0, %v2075
  %v2077 = vrcp.pop %v2063
  %v2078 = vmul.f32 1.0, %v2077
  %v2079 = vrcp.pop %v2064
  %v2080 = vmul.f32 1.0, %v2079
  %v2081 = vmul.f32 %v2034, %v2065
  %v2082 = vmul.f32 %v2036, %v2067
  %v2083 = vmul.f32 %v2038, %v2069
  %v2084 = vmul.f32 %v2040, %v2071
  %v2085 = vmul.f32 %v2042, %v2073
  %v2086 = vmul.f32 %v2044, %v2075
  %v2087 = vmul.f32 %v2046, %v2077
  %v2088 = vmul.f32 %v2048, %v2079
  %v2089 = vsel %vm2049, %v2066, %v2081
  %v2090 = vsel %vm2050, %v2068, %v2082
  %v2091 = vsel %vm2051, %v2070, %v2083
  %v2092 = vsel %vm2052, %v2072, %v2084
  %v2093 = vsel %vm2053, %v2074, %v2085
  %v2094 = vsel %vm2054, %v2076, %v2086
  %v2095 = vsel %vm2055, %v2078, %v2087
  %v2096 = vsel %vm2056, %v2080, %v2088
  %vm2097 = vcmask 0
  %2098 = vst.msk [vmem:[%s8] sm:$0x1] %vm2097, %v2089
  %2099 = vst.msk [vmem:[%s8 + $0x1] sm:$0x1] %vm2097, %v2090
  %2100 = vst.msk [vmem:[%s8 + $0x2] sm:$0x1] %vm2097, %v2091
  %2101 = vst.msk [vmem:[%s8 + $0x3] sm:$0x1] %vm2097, %v2092
  %2102 = vst.msk [vmem:[%s8 + $0x4] sm:$0x1] %vm2097, %v2093
  %2103 = vst.msk [vmem:[%s8 + $0x5] sm:$0x1] %vm2097, %v2094
  %2104 = vst.msk [vmem:[%s8 + $0x6] sm:$0x1] %vm2097, %v2095
  %2105 = vst.msk [vmem:[%s8 + $0x7] sm:$0x1] %vm2097, %v2096
  // Predicated region
  $region30: #{discriminator_forward.1} parent=0 // pred_check
    _
  $region31: #{discriminator_forward.1} parent=0 // pred_check_branch
    %2107 = sbr.rel (0) target = $region33
  $region32: #{discriminator_forward.1} parent=0 // pred_region
    _
  $region33: #{discriminator_forward.1} parent=0 // pred_fallthru
    _
  // Predicated region
  $region34: #{discriminator_forward.1} parent=0 // pred_check
    _
  $region35: #{discriminator_forward.1} parent=0 // pred_check_branch
    %2109 = sbr.rel (0) target = $region37
  $region36: #{discriminator_forward.1} parent=0 // pred_region
    _
  $region37: #{discriminator_forward.1} parent=0 // pred_fallthru
    _
  // Predicated region
  $region38: #{discriminator_forward.1} parent=0 // pred_check
    _
  $region39: #{discriminator_forward.1} parent=0 // pred_check_branch
    %2111 = sbr.rel (0) target = $region41
  $region40: #{discriminator_forward.1} parent=0 // pred_region
    _
  $region41: #{discriminator_forward.1} parent=0 // pred_fallthru
    _
  // Predicated region
  $region42: #{discriminator_forward.1} parent=0 // pred_check
    _
  $region43: #{discriminator_forward.1} parent=0 // pred_check_branch
    %2113 = sbr.rel (0) target = $region45
  $region44: #{discriminator_forward.1} parent=0 // pred_region
    _
  $region45: #{discriminator_forward.1} parent=0 // pred_fallthru
    _

</llo_original>
